<compile_context>
chip_gen: v7x
topology: tpu7x:2x2x1
jax: 0.10.0
libtpu: 0.0.40
codegen_flags: <defaults>
</compile_context>

<pallas_src>
import functools

import jax
import jax.numpy as jnp
from jax.experimental import pallas as pl
from jax.experimental.pallas import tpu as pltpu

_LANE = 128


def _round_up(v, m):
    return (v + m - 1) // m * m


def _actor_kernel(x_ref, wih_ref, whh_ref, b_ref, wlin_ref, blin_ref, out_ref,
                  xproj_ref, hs_ref, *, hidden, max_action):
    """hidden == padded hidden size (multiple of 128)."""
    T = x_ref.shape[0]
    H = hidden

    # (1) Hoisted input projection + bias: one batched MXU matmul over all T
    #     timesteps (i/f/o blocks already carry the folded 0.5 pre-scale).
    xproj_ref[...] = (
        jnp.dot(x_ref[...], wih_ref[...], preferred_element_type=jnp.float32)
        + b_ref[...])                                              # (T, 4H)

    # Loop-invariant recurrent weight, hoisted.
    whh = whh_ref[...]                                             # (H, 4H)

    h = jnp.zeros((1, H), jnp.float32)
    c = jnp.zeros((1, H), jnp.float32)

    # (2) Recurrence, statically unrolled: only the serial dependency
    #     (h @ W_hh) and the gate nonlinearity chain remain inside.
    for t in range(T):
        gates = xproj_ref[pl.ds(t, 1), :] + jnp.dot(
            h, whh, preferred_element_type=jnp.float32)            # (1, 4H)
        # Gate slices fall exactly on 128-lane vreg boundaries (H = 128).
        # i/f/o pre-activations are pre-scaled by 0.5 at pack time, so
        # sigmoid(z) == 0.5*tanh(z/2) + 0.5 == 0.5*tanh(gates) + 0.5.
        i_g = 0.5 * jnp.tanh(gates[:, 0 * H:1 * H]) + 0.5
        f_g = 0.5 * jnp.tanh(gates[:, 1 * H:2 * H]) + 0.5
        g_g = jnp.tanh(gates[:, 2 * H:3 * H])
        o_g = 0.5 * jnp.tanh(gates[:, 3 * H:4 * H]) + 0.5
        c = f_g * c + i_g * g_g
        h = o_g * jnp.tanh(c)
        hs_ref[pl.ds(t, 1), :] = h        # off the carry / critical path

    # (3) Deferred output head: one MXU matmul, one tanh, one lane-dense store.
    out_ref[...] = max_action * jnp.tanh(
        jnp.dot(hs_ref[...], wlin_ref[...], preferred_element_type=jnp.float32)
        + blin_ref[...])


def pack_params(params):
    """Pre-pack / pad parameters ONCE (hoisted out of the per-call path).

    Folds the 0.5 pre-scale of the tanh-form sigmoid into the i/f/o gate
    blocks (not the g block) of W_ih, W_hh and the combined bias, pads the
    hidden and action dims to 128 lanes, and transposes for MXU layout.
    """
    f32 = lambda a: jnp.asarray(a, jnp.float32)
    w_ih = f32(params["w_ih"])                              # (4H, D)
    w_hh = f32(params["w_hh"])                              # (4H, H)
    bias = f32(params["b_ih"]) + f32(params["b_hh"])        # (4H,)
    w_lin = f32(params["w_lin"])                            # (A, H)
    b_lin = f32(params["b_lin"])                            # (A,)

    H = w_hh.shape[1]
    D = w_ih.shape[1]
    A = w_lin.shape[0]
    Hp = _round_up(H, _LANE)          # pad hidden to a full vreg (128)
    Ap = _round_up(A, _LANE)          # pad action dim for a lane-dense store

    # 0.5 pre-scale for i, f, o gates only (g = cell candidate stays 1.0).
    gate_scale = jnp.array([0.5, 0.5, 1.0, 0.5], jnp.float32)

    def pack_gate_weight(w, in_dim, in_pad):
        # (4H, in_dim) -> scaled, gate-padded, transposed (in_pad, 4Hp).
        w = w.reshape(4, H, in_dim) * gate_scale[:, None, None]
        w = jnp.pad(w, ((0, 0), (0, Hp - H), (0, in_pad - in_dim)))
        return w.reshape(4 * Hp, in_pad).T

    wih_T = pack_gate_weight(w_ih, D, D)                    # (D, 4Hp)
    whh_T = pack_gate_weight(w_hh, H, Hp)                   # (Hp, 4Hp)

    b = bias.reshape(4, H) * gate_scale[:, None]
    b = jnp.pad(b, ((0, 0), (0, Hp - H))).reshape(1, 4 * Hp)   # (1, 4Hp)

    wlin_T = jnp.pad(w_lin.T, ((0, Hp - H), (0, Ap - A)))   # (Hp, Ap)
    blin = jnp.pad(b_lin, (0, Ap - A)).reshape(1, Ap)       # (1, Ap)

    return {
        "wih_T": wih_T, "whh_T": whh_T, "bias": b,
        "wlin_T": wlin_T, "blin": blin,
        "hidden_pad": Hp, "act_dim": A, "act_dim_pad": Ap,
    }


def actor_forward(x, packed, max_action):
    """x: (batch, obs_dim) float32 -> actions: (batch, act_dim) float32.

    `packed` is the output of pack_params() — reuse it across calls.
    """
    x = jnp.asarray(x, jnp.float32)
    T = x.shape[0]
    Hp = packed["hidden_pad"]
    A = packed["act_dim"]
    Ap = packed["act_dim_pad"]

    kernel = functools.partial(
        _actor_kernel, hidden=Hp, max_action=float(max_action))

    out = pl.pallas_call(
        kernel,
        out_shape=jax.ShapeDtypeStruct((T, Ap), jnp.float32),
        in_specs=[pl.BlockSpec(memory_space=pltpu.MemorySpace.VMEM)] * 6,
        out_specs=pl.BlockSpec(memory_space=pltpu.MemorySpace.VMEM),
        scratch_shapes=[
            pltpu.VMEM((T, 4 * Hp), jnp.float32),   # hoisted input projection
            pltpu.VMEM((T, Hp), jnp.float32),       # per-step hidden states
        ],
    )(x, packed["wih_T"], packed["whh_T"], packed["bias"],
      packed["wlin_T"], packed["blin"])
    return out[:, :A]


def actor_forward_ref(x, params, max_action):
    """Pure-JAX reference (mirrors torch.nn.LSTM + Linear + Tanh)."""
    H = params["w_hh"].shape[1]
    wih_T = params["w_ih"].T
    whh_T = params["w_hh"].T
    b = params["b_ih"] + params["b_hh"]

    def step(carry, x_t):
        h, c = carry
        gates = x_t @ wih_T + h @ whh_T + b
        i = jax.nn.sigmoid(gates[0 * H:1 * H])
        f = jax.nn.sigmoid(gates[1 * H:2 * H])
        g = jnp.tanh(gates[2 * H:3 * H])
        o = jax.nn.sigmoid(gates[3 * H:4 * H])
        c_new = f * c + i * g
        h_new = o * jnp.tanh(c_new)
        return (h_new, c_new), h_new

    (_, _), hs = jax.lax.scan(step, (jnp.zeros((H,)), jnp.zeros((H,))), x)
    return max_action * jnp.tanh(hs @ params["w_lin"].T + params["b_lin"])


def init_params(key, obs_dim, hidden, act_dim):
    """Deterministic init mirroring the PyTorch layer shapes."""
    ks = jax.random.split(key, 6)
    s = 1.0 / jnp.sqrt(hidden)
    u = lambda k, shape: jax.random.uniform(k, shape, jnp.float32, -s, s)
    return {
        "w_ih": u(ks[0], (4 * hidden, obs_dim)),
        "w_hh": u(ks[1], (4 * hidden, hidden)),
        "b_ih": u(ks[2], (4 * hidden,)),
        "b_hh": u(ks[3], (4 * hidden,)),
        "w_lin": u(ks[4], (act_dim, hidden)),
        "b_lin": u(ks[5], (act_dim,)),
    }


if __name__ == "__main__":
    BATCH = 8        # becomes the LSTM sequence length (per torch reshape)
    OBS_DIM = 10     # args.obs_shape[agent_id]
    HIDDEN = 64
    ACT_DIM = 5      # args.action_shape[agent_id]
    MAX_ACTION = 1.0 # args.high_action

    key = jax.random.PRNGKey(0)
    kx, kp = jax.random.split(key)
    x = jax.random.normal(kx, (BATCH, OBS_DIM), jnp.float32)
    params = init_params(kp, OBS_DIM, HIDDEN, ACT_DIM)

    # Pack / pad parameters ONCE; reuse across every forward call.
    packed = jax.tree_util.tree_map(
        lambda a: jax.block_until_ready(a) if isinstance(a, jax.Array) else a,
        pack_params(params))

    actions = actor_forward(x, packed, MAX_ACTION)
    actions = jax.block_until_ready(actions)

    ref = actor_forward_ref(x, params, MAX_ACTION)
    assert actions.shape == (BATCH, ACT_DIM)
    assert jnp.allclose(actions, ref, atol=1e-5, rtol=1e-5)

    print("KERNEL_OK")
</pallas_src>

<mosaic_0001>
module attributes {stable_mosaic.version = 11 : i64} {
  func.func @_actor_kernel(%arg0: memref<8x10xf32, #tpu.memory_space<vmem>>, %arg1: memref<10x512xf32, #tpu.memory_space<vmem>>, %arg2: memref<128x512xf32, #tpu.memory_space<vmem>>, %arg3: memref<1x512xf32, #tpu.memory_space<vmem>>, %arg4: memref<128x128xf32, #tpu.memory_space<vmem>>, %arg5: memref<1x128xf32, #tpu.memory_space<vmem>>, %arg6: memref<8x128xf32, #tpu.memory_space<vmem>>, %arg7: memref<8x512xf32, #tpu.memory_space<vmem>>, %arg8: memref<8x128xf32, #tpu.memory_space<vmem>>) attributes {dimension_semantics = [], scalar_prefetch = 0 : i64, scratch_operands = 2 : i64, tpu.core_type = #tpu.core_type<tc>} {
    %c0 = arith.constant 0 : index
    %c0_0 = arith.constant 0 : index
    %0 = vector.load %arg0[%c0, %c0_0] : memref<8x10xf32, #tpu.memory_space<vmem>>, vector<8x10xf32>
    %c0_1 = arith.constant 0 : index
    %c0_2 = arith.constant 0 : index
    %1 = vector.load %arg1[%c0_1, %c0_2] : memref<10x512xf32, #tpu.memory_space<vmem>>, vector<10x512xf32>
    %cst = arith.constant dense<0.000000e+00> : vector<8x512xf32>
    %2 = tpu.matmul %0, %1, %cst {dimension_numbers = #tpu.dot_dimension_numbers<[1], [0], [0], [1], [0, 0, 1, 1], [], []>} : vector<8x10xf32>, vector<10x512xf32>, vector<8x512xf32> -> vector<8x512xf32>
    %c0_3 = arith.constant 0 : index
    %c0_4 = arith.constant 0 : index
    %3 = vector.load %arg3[%c0_3, %c0_4] : memref<1x512xf32, #tpu.memory_space<vmem>>, vector<1x512xf32>
    %4 = vector.broadcast %3 : vector<1x512xf32> to vector<8x512xf32>
    %5 = arith.addf %2, %4 : vector<8x512xf32>
    %c0_5 = arith.constant 0 : index
    %c0_6 = arith.constant 0 : index
    %6 = vector.load %arg7[%c0_5, %c0_6] : memref<8x512xf32, #tpu.memory_space<vmem>>, vector<8x512xf32>
    tpu.vector_store %arg7[%c0_5, %c0_6], %5 {strides = array<i32>} : memref<8x512xf32, #tpu.memory_space<vmem>>, vector<8x512xf32>,
    %c0_7 = arith.constant 0 : index
    %c0_8 = arith.constant 0 : index
    %7 = vector.load %arg2[%c0_7, %c0_8] : memref<128x512xf32, #tpu.memory_space<vmem>>, vector<128x512xf32>
    %cst_9 = arith.constant 0.000000e+00 : f32
    %8 = vector.broadcast %cst_9 : f32 to vector<1x128xf32>
    %cst_10 = arith.constant 0.000000e+00 : f32
    %9 = vector.broadcast %cst_10 : f32 to vector<1x128xf32>
    %c0_11 = arith.constant 0 : index
    %c0_12 = arith.constant 0 : index
    %10 = vector.load %arg7[%c0_11, %c0_12] : memref<8x512xf32, #tpu.memory_space<vmem>>, vector<1x512xf32>
    %cst_13 = arith.constant dense<0.000000e+00> : vector<1x512xf32>
    %11 = tpu.matmul %8, %7, %cst_13 {dimension_numbers = #tpu.dot_dimension_numbers<[1], [0], [0], [1], [0, 0, 1, 1], [], []>} : vector<1x128xf32>, vector<128x512xf32>, vector<1x512xf32> -> vector<1x512xf32>
    %12 = arith.addf %10, %11 : vector<1x512xf32>
    %13 = vector.extract_strided_slice %12 {offsets = [0, 0], sizes = [1, 128], strides = [1, 1]} : vector<1x512xf32> to vector<1x128xf32>
    %14 = math.tanh %13 : vector<1x128xf32>
    %cst_14 = arith.constant 5.000000e-01 : f32
    %15 = vector.broadcast %cst_14 : f32 to vector<1x128xf32>
    %16 = arith.mulf %15, %14 : vector<1x128xf32>
    %cst_15 = arith.constant 5.000000e-01 : f32
    %17 = vector.broadcast %cst_15 : f32 to vector<1x128xf32>
    %18 = arith.addf %16, %17 : vector<1x128xf32>
    %19 = vector.extract_strided_slice %12 {offsets = [0, 128], sizes = [1, 128], strides = [1, 1]} : vector<1x512xf32> to vector<1x128xf32>
    %20 = math.tanh %19 : vector<1x128xf32>
    %cst_16 = arith.constant 5.000000e-01 : f32
    %21 = vector.broadcast %cst_16 : f32 to vector<1x128xf32>
    %22 = arith.mulf %21, %20 : vector<1x128xf32>
    %cst_17 = arith.constant 5.000000e-01 : f32
    %23 = vector.broadcast %cst_17 : f32 to vector<1x128xf32>
    %24 = arith.addf %22, %23 : vector<1x128xf32>
    %25 = vector.extract_strided_slice %12 {offsets = [0, 256], sizes = [1, 128], strides = [1, 1]} : vector<1x512xf32> to vector<1x128xf32>
    %26 = math.tanh %25 : vector<1x128xf32>
    %27 = vector.extract_strided_slice %12 {offsets = [0, 384], sizes = [1, 128], strides = [1, 1]} : vector<1x512xf32> to vector<1x128xf32>
    %28 = math.tanh %27 : vector<1x128xf32>
    %cst_18 = arith.constant 5.000000e-01 : f32
    %29 = vector.broadcast %cst_18 : f32 to vector<1x128xf32>
    %30 = arith.mulf %29, %28 : vector<1x128xf32>
    %cst_19 = arith.constant 5.000000e-01 : f32
    %31 = vector.broadcast %cst_19 : f32 to vector<1x128xf32>
    %32 = arith.addf %30, %31 : vector<1x128xf32>
    %33 = arith.mulf %24, %9 : vector<1x128xf32>
    %34 = arith.mulf %18, %26 : vector<1x128xf32>
    %35 = arith.addf %33, %34 : vector<1x128xf32>
    %36 = math.tanh %35 : vector<1x128xf32>
    %37 = arith.mulf %32, %36 : vector<1x128xf32>
    %c0_20 = arith.constant 0 : index
    %c0_21 = arith.constant 0 : index
    %38 = vector.load %arg8[%c0_20, %c0_21] : memref<8x128xf32, #tpu.memory_space<vmem>>, vector<1x128xf32>
    tpu.vector_store %arg8[%c0_20, %c0_21], %37 {strides = array<i32>} : memref<8x128xf32, #tpu.memory_space<vmem>>, vector<1x128xf32>,
    %c1 = arith.constant 1 : index
    %c0_22 = arith.constant 0 : index
    %39 = vector.load %arg7[%c1, %c0_22] : memref<8x512xf32, #tpu.memory_space<vmem>>, vector<1x512xf32>
    %cst_23 = arith.constant dense<0.000000e+00> : vector<1x512xf32>
    %40 = tpu.matmul %37, %7, %cst_23 {dimension_numbers = #tpu.dot_dimension_numbers<[1], [0], [0], [1], [0, 0, 1, 1], [], []>} : vector<1x128xf32>, vector<128x512xf32>, vector<1x512xf32> -> vector<1x512xf32>
    %41 = arith.addf %39, %40 : vector<1x512xf32>
    %42 = vector.extract_strided_slice %41 {offsets = [0, 0], sizes = [1, 128], strides = [1, 1]} : vector<1x512xf32> to vector<1x128xf32>
    %43 = math.tanh %42 : vector<1x128xf32>
    %cst_24 = arith.constant 5.000000e-01 : f32
    %44 = vector.broadcast %cst_24 : f32 to vector<1x128xf32>
    %45 = arith.mulf %44, %43 : vector<1x128xf32>
    %cst_25 = arith.constant 5.000000e-01 : f32
    %46 = vector.broadcast %cst_25 : f32 to vector<1x128xf32>
    %47 = arith.addf %45, %46 : vector<1x128xf32>
    %48 = vector.extract_strided_slice %41 {offsets = [0, 128], sizes = [1, 128], strides = [1, 1]} : vector<1x512xf32> to vector<1x128xf32>
    %49 = math.tanh %48 : vector<1x128xf32>
    %cst_26 = arith.constant 5.000000e-01 : f32
    %50 = vector.broadcast %cst_26 : f32 to vector<1x128xf32>
    %51 = arith.mulf %50, %49 : vector<1x128xf32>
    %cst_27 = arith.constant 5.000000e-01 : f32
    %52 = vector.broadcast %cst_27 : f32 to vector<1x128xf32>
    %53 = arith.addf %51, %52 : vector<1x128xf32>
    %54 = vector.extract_strided_slice %41 {offsets = [0, 256], sizes = [1, 128], strides = [1, 1]} : vector<1x512xf32> to vector<1x128xf32>
    %55 = math.tanh %54 : vector<1x128xf32>
    %56 = vector.extract_strided_slice %41 {offsets = [0, 384], sizes = [1, 128], strides = [1, 1]} : vector<1x512xf32> to vector<1x128xf32>
    %57 = math.tanh %56 : vector<1x128xf32>
    %cst_28 = arith.constant 5.000000e-01 : f32
    %58 = vector.broadcast %cst_28 : f32 to vector<1x128xf32>
    %59 = arith.mulf %58, %57 : vector<1x128xf32>
    %cst_29 = arith.constant 5.000000e-01 : f32
    %60 = vector.broadcast %cst_29 : f32 to vector<1x128xf32>
    %61 = arith.addf %59, %60 : vector<1x128xf32>
    %62 = arith.mulf %53, %35 : vector<1x128xf32>
    %63 = arith.mulf %47, %55 : vector<1x128xf32>
    %64 = arith.addf %62, %63 : vector<1x128xf32>
    %65 = math.tanh %64 : vector<1x128xf32>
    %66 = arith.mulf %61, %65 : vector<1x128xf32>
    %c1_30 = arith.constant 1 : index
    %c0_31 = arith.constant 0 : index
    %67 = vector.load %arg8[%c1_30, %c0_31] : memref<8x128xf32, #tpu.memory_space<vmem>>, vector<1x128xf32>
    tpu.vector_store %arg8[%c1_30, %c0_31], %66 {strides = array<i32>} : memref<8x128xf32, #tpu.memory_space<vmem>>, vector<1x128xf32>,
    %c2 = arith.constant 2 : index
    %c0_32 = arith.constant 0 : index
    %68 = vector.load %arg7[%c2, %c0_32] : memref<8x512xf32, #tpu.memory_space<vmem>>, vector<1x512xf32>
    %cst_33 = arith.constant dense<0.000000e+00> : vector<1x512xf32>
    %69 = tpu.matmul %66, %7, %cst_33 {dimension_numbers = #tpu.dot_dimension_numbers<[1], [0], [0], [1], [0, 0, 1, 1], [], []>} : vector<1x128xf32>, vector<128x512xf32>, vector<1x512xf32> -> vector<1x512xf32>
    %70 = arith.addf %68, %69 : vector<1x512xf32>
    %71 = vector.extract_strided_slice %70 {offsets = [0, 0], sizes = [1, 128], strides = [1, 1]} : vector<1x512xf32> to vector<1x128xf32>
    %72 = math.tanh %71 : vector<1x128xf32>
    %cst_34 = arith.constant 5.000000e-01 : f32
    %73 = vector.broadcast %cst_34 : f32 to vector<1x128xf32>
    %74 = arith.mulf %73, %72 : vector<1x128xf32>
    %cst_35 = arith.constant 5.000000e-01 : f32
    %75 = vector.broadcast %cst_35 : f32 to vector<1x128xf32>
    %76 = arith.addf %74, %75 : vector<1x128xf32>
    %77 = vector.extract_strided_slice %70 {offsets = [0, 128], sizes = [1, 128], strides = [1, 1]} : vector<1x512xf32> to vector<1x128xf32>
    %78 = math.tanh %77 : vector<1x128xf32>
    %cst_36 = arith.constant 5.000000e-01 : f32
    %79 = vector.broadcast %cst_36 : f32 to vector<1x128xf32>
    %80 = arith.mulf %79, %78 : vector<1x128xf32>
    %cst_37 = arith.constant 5.000000e-01 : f32
    %81 = vector.broadcast %cst_37 : f32 to vector<1x128xf32>
    %82 = arith.addf %80, %81 : vector<1x128xf32>
    %83 = vector.extract_strided_slice %70 {offsets = [0, 256], sizes = [1, 128], strides = [1, 1]} : vector<1x512xf32> to vector<1x128xf32>
    %84 = math.tanh %83 : vector<1x128xf32>
    %85 = vector.extract_strided_slice %70 {offsets = [0, 384], sizes = [1, 128], strides = [1, 1]} : vector<1x512xf32> to vector<1x128xf32>
    %86 = math.tanh %85 : vector<1x128xf32>
    %cst_38 = arith.constant 5.000000e-01 : f32
    %87 = vector.broadcast %cst_38 : f32 to vector<1x128xf32>
    %88 = arith.mulf %87, %86 : vector<1x128xf32>
    %cst_39 = arith.constant 5.000000e-01 : f32
    %89 = vector.broadcast %cst_39 : f32 to vector<1x128xf32>
    %90 = arith.addf %88, %89 : vector<1x128xf32>
    %91 = arith.mulf %82, %64 : vector<1x128xf32>
    %92 = arith.mulf %76, %84 : vector<1x128xf32>
    %93 = arith.addf %91, %92 : vector<1x128xf32>
    %94 = math.tanh %93 : vector<1x128xf32>
    %95 = arith.mulf %90, %94 : vector<1x128xf32>
    %c2_40 = arith.constant 2 : index
    %c0_41 = arith.constant 0 : index
    %96 = vector.load %arg8[%c2_40, %c0_41] : memref<8x128xf32, #tpu.memory_space<vmem>>, vector<1x128xf32>
    tpu.vector_store %arg8[%c2_40, %c0_41], %95 {strides = array<i32>} : memref<8x128xf32, #tpu.memory_space<vmem>>, vector<1x128xf32>,
    %c3 = arith.constant 3 : index
    %c0_42 = arith.constant 0 : index
    %97 = vector.load %arg7[%c3, %c0_42] : memref<8x512xf32, #tpu.memory_space<vmem>>, vector<1x512xf32>
    %cst_43 = arith.constant dense<0.000000e+00> : vector<1x512xf32>
    %98 = tpu.matmul %95, %7, %cst_43 {dimension_numbers = #tpu.dot_dimension_numbers<[1], [0], [0], [1], [0, 0, 1, 1], [], []>} : vector<1x128xf32>, vector<128x512xf32>, vector<1x512xf32> -> vector<1x512xf32>
    %99 = arith.addf %97, %98 : vector<1x512xf32>
    %100 = vector.extract_strided_slice %99 {offsets = [0, 0], sizes = [1, 128], strides = [1, 1]} : vector<1x512xf32> to vector<1x128xf32>
    %101 = math.tanh %100 : vector<1x128xf32>
    %cst_44 = arith.constant 5.000000e-01 : f32
    %102 = vector.broadcast %cst_44 : f32 to vector<1x128xf32>
    %103 = arith.mulf %102, %101 : vector<1x128xf32>
    %cst_45 = arith.constant 5.000000e-01 : f32
    %104 = vector.broadcast %cst_45 : f32 to vector<1x128xf32>
    %105 = arith.addf %103, %104 : vector<1x128xf32>
    %106 = vector.extract_strided_slice %99 {offsets = [0, 128], sizes = [1, 128], strides = [1, 1]} : vector<1x512xf32> to vector<1x128xf32>
    %107 = math.tanh %106 : vector<1x128xf32>
    %cst_46 = arith.constant 5.000000e-01 : f32
    %108 = vector.broadcast %cst_46 : f32 to vector<1x128xf32>
    %109 = arith.mulf %108, %107 : vector<1x128xf32>
    %cst_47 = arith.constant 5.000000e-01 : f32
    %110 = vector.broadcast %cst_47 : f32 to vector<1x128xf32>
    %111 = arith.addf %109, %110 : vector<1x128xf32>
    %112 = vector.extract_strided_slice %99 {offsets = [0, 256], sizes = [1, 128], strides = [1, 1]} : vector<1x512xf32> to vector<1x128xf32>
    %113 = math.tanh %112 : vector<1x128xf32>
    %114 = vector.extract_strided_slice %99 {offsets = [0, 384], sizes = [1, 128], strides = [1, 1]} : vector<1x512xf32> to vector<1x128xf32>
    %115 = math.tanh %114 : vector<1x128xf32>
    %cst_48 = arith.constant 5.000000e-01 : f32
    %116 = vector.broadcast %cst_48 : f32 to vector<1x128xf32>
    %117 = arith.mulf %116, %115 : vector<1x128xf32>
    %cst_49 = arith.constant 5.000000e-01 : f32
    %118 = vector.broadcast %cst_49 : f32 to vector<1x128xf32>
    %119 = arith.addf %117, %118 : vector<1x128xf32>
    %120 = arith.mulf %111, %93 : vector<1x128xf32>
    %121 = arith.mulf %105, %113 : vector<1x128xf32>
    %122 = arith.addf %120, %121 : vector<1x128xf32>
    %123 = math.tanh %122 : vector<1x128xf32>
    %124 = arith.mulf %119, %123 : vector<1x128xf32>
    %c3_50 = arith.constant 3 : index
    %c0_51 = arith.constant 0 : index
    %125 = vector.load %arg8[%c3_50, %c0_51] : memref<8x128xf32, #tpu.memory_space<vmem>>, vector<1x128xf32>
    tpu.vector_store %arg8[%c3_50, %c0_51], %124 {strides = array<i32>} : memref<8x128xf32, #tpu.memory_space<vmem>>, vector<1x128xf32>,
    %c4 = arith.constant 4 : index
    %c0_52 = arith.constant 0 : index
    %126 = vector.load %arg7[%c4, %c0_52] : memref<8x512xf32, #tpu.memory_space<vmem>>, vector<1x512xf32>
    %cst_53 = arith.constant dense<0.000000e+00> : vector<1x512xf32>
    %127 = tpu.matmul %124, %7, %cst_53 {dimension_numbers = #tpu.dot_dimension_numbers<[1], [0], [0], [1], [0, 0, 1, 1], [], []>} : vector<1x128xf32>, vector<128x512xf32>, vector<1x512xf32> -> vector<1x512xf32>
    %128 = arith.addf %126, %127 : vector<1x512xf32>
    %129 = vector.extract_strided_slice %128 {offsets = [0, 0], sizes = [1, 128], strides = [1, 1]} : vector<1x512xf32> to vector<1x128xf32>
    %130 = math.tanh %129 : vector<1x128xf32>
    %cst_54 = arith.constant 5.000000e-01 : f32
    %131 = vector.broadcast %cst_54 : f32 to vector<1x128xf32>
    %132 = arith.mulf %131, %130 : vector<1x128xf32>
    %cst_55 = arith.constant 5.000000e-01 : f32
    %133 = vector.broadcast %cst_55 : f32 to vector<1x128xf32>
    %134 = arith.addf %132, %133 : vector<1x128xf32>
    %135 = vector.extract_strided_slice %128 {offsets = [0, 128], sizes = [1, 128], strides = [1, 1]} : vector<1x512xf32> to vector<1x128xf32>
    %136 = math.tanh %135 : vector<1x128xf32>
    %cst_56 = arith.constant 5.000000e-01 : f32
    %137 = vector.broadcast %cst_56 : f32 to vector<1x128xf32>
    %138 = arith.mulf %137, %136 : vector<1x128xf32>
    %cst_57 = arith.constant 5.000000e-01 : f32
    %139 = vector.broadcast %cst_57 : f32 to vector<1x128xf32>
    %140 = arith.addf %138, %139 : vector<1x128xf32>
    %141 = vector.extract_strided_slice %128 {offsets = [0, 256], sizes = [1, 128], strides = [1, 1]} : vector<1x512xf32> to vector<1x128xf32>
    %142 = math.tanh %141 : vector<1x128xf32>
    %143 = vector.extract_strided_slice %128 {offsets = [0, 384], sizes = [1, 128], strides = [1, 1]} : vector<1x512xf32> to vector<1x128xf32>
    %144 = math.tanh %143 : vector<1x128xf32>
    %cst_58 = arith.constant 5.000000e-01 : f32
    %145 = vector.broadcast %cst_58 : f32 to vector<1x128xf32>
    %146 = arith.mulf %145, %144 : vector<1x128xf32>
    %cst_59 = arith.constant 5.000000e-01 : f32
    %147 = vector.broadcast %cst_59 : f32 to vector<1x128xf32>
    %148 = arith.addf %146, %147 : vector<1x128xf32>
    %149 = arith.mulf %140, %122 : vector<1x128xf32>
    %150 = arith.mulf %134, %142 : vector<1x128xf32>
    %151 = arith.addf %149, %150 : vector<1x128xf32>
    %152 = math.tanh %151 : vector<1x128xf32>
    %153 = arith.mulf %148, %152 : vector<1x128xf32>
    %c4_60 = arith.constant 4 : index
    %c0_61 = arith.constant 0 : index
    %154 = vector.load %arg8[%c4_60, %c0_61] : memref<8x128xf32, #tpu.memory_space<vmem>>, vector<1x128xf32>
    tpu.vector_store %arg8[%c4_60, %c0_61], %153 {strides = array<i32>} : memref<8x128xf32, #tpu.memory_space<vmem>>, vector<1x128xf32>,
    %c5 = arith.constant 5 : index
    %c0_62 = arith.constant 0 : index
    %155 = vector.load %arg7[%c5, %c0_62] : memref<8x512xf32, #tpu.memory_space<vmem>>, vector<1x512xf32>
    %cst_63 = arith.constant dense<0.000000e+00> : vector<1x512xf32>
    %156 = tpu.matmul %153, %7, %cst_63 {dimension_numbers = #tpu.dot_dimension_numbers<[1], [0], [0], [1], [0, 0, 1, 1], [], []>} : vector<1x128xf32>, vector<128x512xf32>, vector<1x512xf32> -> vector<1x512xf32>
    %157 = arith.addf %155, %156 : vector<1x512xf32>
    %158 = vector.extract_strided_slice %157 {offsets = [0, 0], sizes = [1, 128], strides = [1, 1]} : vector<1x512xf32> to vector<1x128xf32>
    %159 = math.tanh %158 : vector<1x128xf32>
    %cst_64 = arith.constant 5.000000e-01 : f32
    %160 = vector.broadcast %cst_64 : f32 to vector<1x128xf32>
    %161 = arith.mulf %160, %159 : vector<1x128xf32>
    %cst_65 = arith.constant 5.000000e-01 : f32
    %162 = vector.broadcast %cst_65 : f32 to vector<1x128xf32>
    %163 = arith.addf %161, %162 : vector<1x128xf32>
    %164 = vector.extract_strided_slice %157 {offsets = [0, 128], sizes = [1, 128], strides = [1, 1]} : vector<1x512xf32> to vector<1x128xf32>
    %165 = math.tanh %164 : vector<1x128xf32>
    %cst_66 = arith.constant 5.000000e-01 : f32
    %166 = vector.broadcast %cst_66 : f32 to vector<1x128xf32>
    %167 = arith.mulf %166, %165 : vector<1x128xf32>
    %cst_67 = arith.constant 5.000000e-01 : f32
    %168 = vector.broadcast %cst_67 : f32 to vector<1x128xf32>
    %169 = arith.addf %167, %168 : vector<1x128xf32>
    %170 = vector.extract_strided_slice %157 {offsets = [0, 256], sizes = [1, 128], strides = [1, 1]} : vector<1x512xf32> to vector<1x128xf32>
    %171 = math.tanh %170 : vector<1x128xf32>
    %172 = vector.extract_strided_slice %157 {offsets = [0, 384], sizes = [1, 128], strides = [1, 1]} : vector<1x512xf32> to vector<1x128xf32>
    %173 = math.tanh %172 : vector<1x128xf32>
    %cst_68 = arith.constant 5.000000e-01 : f32
    %174 = vector.broadcast %cst_68 : f32 to vector<1x128xf32>
    %175 = arith.mulf %174, %173 : vector<1x128xf32>
    %cst_69 = arith.constant 5.000000e-01 : f32
    %176 = vector.broadcast %cst_69 : f32 to vector<1x128xf32>
    %177 = arith.addf %175, %176 : vector<1x128xf32>
    %178 = arith.mulf %169, %151 : vector<1x128xf32>
    %179 = arith.mulf %163, %171 : vector<1x128xf32>
    %180 = arith.addf %178, %179 : vector<1x128xf32>
    %181 = math.tanh %180 : vector<1x128xf32>
    %182 = arith.mulf %177, %181 : vector<1x128xf32>
    %c5_70 = arith.constant 5 : index
    %c0_71 = arith.constant 0 : index
    %183 = vector.load %arg8[%c5_70, %c0_71] : memref<8x128xf32, #tpu.memory_space<vmem>>, vector<1x128xf32>
    tpu.vector_store %arg8[%c5_70, %c0_71], %182 {strides = array<i32>} : memref<8x128xf32, #tpu.memory_space<vmem>>, vector<1x128xf32>,
    %c6 = arith.constant 6 : index
    %c0_72 = arith.constant 0 : index
    %184 = vector.load %arg7[%c6, %c0_72] : memref<8x512xf32, #tpu.memory_space<vmem>>, vector<1x512xf32>
    %cst_73 = arith.constant dense<0.000000e+00> : vector<1x512xf32>
    %185 = tpu.matmul %182, %7, %cst_73 {dimension_numbers = #tpu.dot_dimension_numbers<[1], [0], [0], [1], [0, 0, 1, 1], [], []>} : vector<1x128xf32>, vector<128x512xf32>, vector<1x512xf32> -> vector<1x512xf32>
    %186 = arith.addf %184, %185 : vector<1x512xf32>
    %187 = vector.extract_strided_slice %186 {offsets = [0, 0], sizes = [1, 128], strides = [1, 1]} : vector<1x512xf32> to vector<1x128xf32>
    %188 = math.tanh %187 : vector<1x128xf32>
    %cst_74 = arith.constant 5.000000e-01 : f32
    %189 = vector.broadcast %cst_74 : f32 to vector<1x128xf32>
    %190 = arith.mulf %189, %188 : vector<1x128xf32>
    %cst_75 = arith.constant 5.000000e-01 : f32
    %191 = vector.broadcast %cst_75 : f32 to vector<1x128xf32>
    %192 = arith.addf %190, %191 : vector<1x128xf32>
    %193 = vector.extract_strided_slice %186 {offsets = [0, 128], sizes = [1, 128], strides = [1, 1]} : vector<1x512xf32> to vector<1x128xf32>
    %194 = math.tanh %193 : vector<1x128xf32>
    %cst_76 = arith.constant 5.000000e-01 : f32
    %195 = vector.broadcast %cst_76 : f32 to vector<1x128xf32>
    %196 = arith.mulf %195, %194 : vector<1x128xf32>
    %cst_77 = arith.constant 5.000000e-01 : f32
    %197 = vector.broadcast %cst_77 : f32 to vector<1x128xf32>
    %198 = arith.addf %196, %197 : vector<1x128xf32>
    %199 = vector.extract_strided_slice %186 {offsets = [0, 256], sizes = [1, 128], strides = [1, 1]} : vector<1x512xf32> to vector<1x128xf32>
    %200 = math.tanh %199 : vector<1x128xf32>
    %201 = vector.extract_strided_slice %186 {offsets = [0, 384], sizes = [1, 128], strides = [1, 1]} : vector<1x512xf32> to vector<1x128xf32>
    %202 = math.tanh %201 : vector<1x128xf32>
    %cst_78 = arith.constant 5.000000e-01 : f32
    %203 = vector.broadcast %cst_78 : f32 to vector<1x128xf32>
    %204 = arith.mulf %203, %202 : vector<1x128xf32>
    %cst_79 = arith.constant 5.000000e-01 : f32
    %205 = vector.broadcast %cst_79 : f32 to vector<1x128xf32>
    %206 = arith.addf %204, %205 : vector<1x128xf32>
    %207 = arith.mulf %198, %180 : vector<1x128xf32>
    %208 = arith.mulf %192, %200 : vector<1x128xf32>
    %209 = arith.addf %207, %208 : vector<1x128xf32>
    %210 = math.tanh %209 : vector<1x128xf32>
    %211 = arith.mulf %206, %210 : vector<1x128xf32>
    %c6_80 = arith.constant 6 : index
    %c0_81 = arith.constant 0 : index
    %212 = vector.load %arg8[%c6_80, %c0_81] : memref<8x128xf32, #tpu.memory_space<vmem>>, vector<1x128xf32>
    tpu.vector_store %arg8[%c6_80, %c0_81], %211 {strides = array<i32>} : memref<8x128xf32, #tpu.memory_space<vmem>>, vector<1x128xf32>,
    %c7 = arith.constant 7 : index
    %c0_82 = arith.constant 0 : index
    %213 = vector.load %arg7[%c7, %c0_82] : memref<8x512xf32, #tpu.memory_space<vmem>>, vector<1x512xf32>
    %cst_83 = arith.constant dense<0.000000e+00> : vector<1x512xf32>
    %214 = tpu.matmul %211, %7, %cst_83 {dimension_numbers = #tpu.dot_dimension_numbers<[1], [0], [0], [1], [0, 0, 1, 1], [], []>} : vector<1x128xf32>, vector<128x512xf32>, vector<1x512xf32> -> vector<1x512xf32>
    %215 = arith.addf %213, %214 : vector<1x512xf32>
    %216 = vector.extract_strided_slice %215 {offsets = [0, 0], sizes = [1, 128], strides = [1, 1]} : vector<1x512xf32> to vector<1x128xf32>
    %217 = math.tanh %216 : vector<1x128xf32>
    %cst_84 = arith.constant 5.000000e-01 : f32
    %218 = vector.broadcast %cst_84 : f32 to vector<1x128xf32>
    %219 = arith.mulf %218, %217 : vector<1x128xf32>
    %cst_85 = arith.constant 5.000000e-01 : f32
    %220 = vector.broadcast %cst_85 : f32 to vector<1x128xf32>
    %221 = arith.addf %219, %220 : vector<1x128xf32>
    %222 = vector.extract_strided_slice %215 {offsets = [0, 128], sizes = [1, 128], strides = [1, 1]} : vector<1x512xf32> to vector<1x128xf32>
    %223 = math.tanh %222 : vector<1x128xf32>
    %cst_86 = arith.constant 5.000000e-01 : f32
    %224 = vector.broadcast %cst_86 : f32 to vector<1x128xf32>
    %225 = arith.mulf %224, %223 : vector<1x128xf32>
    %cst_87 = arith.constant 5.000000e-01 : f32
    %226 = vector.broadcast %cst_87 : f32 to vector<1x128xf32>
    %227 = arith.addf %225, %226 : vector<1x128xf32>
    %228 = vector.extract_strided_slice %215 {offsets = [0, 256], sizes = [1, 128], strides = [1, 1]} : vector<1x512xf32> to vector<1x128xf32>
    %229 = math.tanh %228 : vector<1x128xf32>
    %230 = vector.extract_strided_slice %215 {offsets = [0, 384], sizes = [1, 128], strides = [1, 1]} : vector<1x512xf32> to vector<1x128xf32>
    %231 = math.tanh %230 : vector<1x128xf32>
    %cst_88 = arith.constant 5.000000e-01 : f32
    %232 = vector.broadcast %cst_88 : f32 to vector<1x128xf32>
    %233 = arith.mulf %232, %231 : vector<1x128xf32>
    %cst_89 = arith.constant 5.000000e-01 : f32
    %234 = vector.broadcast %cst_89 : f32 to vector<1x128xf32>
    %235 = arith.addf %233, %234 : vector<1x128xf32>
    %236 = arith.mulf %227, %209 : vector<1x128xf32>
    %237 = arith.mulf %221, %229 : vector<1x128xf32>
    %238 = arith.addf %236, %237 : vector<1x128xf32>
    %239 = math.tanh %238 : vector<1x128xf32>
    %240 = arith.mulf %235, %239 : vector<1x128xf32>
    %c7_90 = arith.constant 7 : index
    %c0_91 = arith.constant 0 : index
    %241 = vector.load %arg8[%c7_90, %c0_91] : memref<8x128xf32, #tpu.memory_space<vmem>>, vector<1x128xf32>
    tpu.vector_store %arg8[%c7_90, %c0_91], %240 {strides = array<i32>} : memref<8x128xf32, #tpu.memory_space<vmem>>, vector<1x128xf32>,
    %c0_92 = arith.constant 0 : index
    %c0_93 = arith.constant 0 : index
    %242 = vector.load %arg8[%c0_92, %c0_93] : memref<8x128xf32, #tpu.memory_space<vmem>>, vector<8x128xf32>
    %c0_94 = arith.constant 0 : index
    %c0_95 = arith.constant 0 : index
    %243 = vector.load %arg4[%c0_94, %c0_95] : memref<128x128xf32, #tpu.memory_space<vmem>>, vector<128x128xf32>
    %cst_96 = arith.constant dense<0.000000e+00> : vector<8x128xf32>
    %244 = tpu.matmul %242, %243, %cst_96 {dimension_numbers = #tpu.dot_dimension_numbers<[1], [0], [0], [1], [0, 0, 1, 1], [], []>} : vector<8x128xf32>, vector<128x128xf32>, vector<8x128xf32> -> vector<8x128xf32>
    %c0_97 = arith.constant 0 : index
    %c0_98 = arith.constant 0 : index
    %245 = vector.load %arg5[%c0_97, %c0_98] : memref<1x128xf32, #tpu.memory_space<vmem>>, vector<1x128xf32>
    %246 = vector.broadcast %245 : vector<1x128xf32> to vector<8x128xf32>
    %247 = arith.addf %244, %246 : vector<8x128xf32>
    %248 = math.tanh %247 : vector<8x128xf32>
    %cst_99 = arith.constant 1.000000e+00 : f32
    %249 = vector.broadcast %cst_99 : f32 to vector<8x128xf32>
    %250 = arith.mulf %249, %248 : vector<8x128xf32>
    %c0_100 = arith.constant 0 : index
    %c0_101 = arith.constant 0 : index
    %251 = vector.load %arg6[%c0_100, %c0_101] : memref<8x128xf32, #tpu.memory_space<vmem>>, vector<8x128xf32>
    tpu.vector_store %arg6[%c0_100, %c0_101], %250 {strides = array<i32>} : memref<8x128xf32, #tpu.memory_space<vmem>>, vector<8x128xf32>,
    return
  }
}

</mosaic_0001>

<llo_original>
// kernel: tpu_custom_call.1
$region0: #{tpu_custom_call.1}
  #allocation0 [shape = 'u32[]', space=smem, size = 0x4, offset = 0x4, fixed_abs, tag = 'smem constant byte address 0x4 - core index']
  #allocation1 [shape = 'u32[144,128]{1,0:T(1,128)}', space=vmem, size = 0x12000, scoped, tag = 'internal scratch']
  #allocation2 [shape = 'f32[8,512]{1,0:T(8,128)}', space=vmem, size = 0x4000, scoped, tag = 'scratch operand']
  #allocation3 [shape = 'f32[8,128]{1,0:T(8,128)}', space=vmem, size = 0x1000, scoped, tag = 'scratch operand']
  %s0 = inlined_call_operand.hbm [shape: f32[8,10], index: 0, kind: input, shape index: {}]
  %s1 = inlined_call_operand.hbm [shape: f32[10,512], index: 1, kind: input, shape index: {}]
  %s2 = inlined_call_operand.hbm [shape: f32[128,512], index: 2, kind: input, shape index: {}]
  %s3 = inlined_call_operand.vmem [shape: f32[1,512], index: 3, kind: input, shape index: {}]
  %s4 = inlined_call_operand.hbm [shape: f32[128,128], index: 4, kind: input, shape index: {}]
  %s5 = inlined_call_operand.vmem [shape: f32[1,128], index: 5, kind: input, shape index: {}]
  %s6 = inlined_call_operand.hbm [shape: f32[8,128], index: 6, kind: output, shape index: {}]
  %s7 = sld [smem:[#allocation0]]
  $region50: #{tpu_custom_call.1} parent=0
    _
  %s9 = ssub.s32 1, %s7
  %s10 = scalar_select 0, %s9, %s7
  $region1: #{tpu_custom_call.1} parent=0
    #allocation4 [shape = 'u8[4096]{0}', space=vmem, size = 0x1000, scoped, tag = 'input window, operand 0, single buffered']
    #allocation5 [shape = 's32[1]{0}', space=sflag, size = 0x4, scoped, tag = 'scoped memory for tpu_custom_call.1']
    #allocation6 [shape = 's32[1]{0}', space=sflag, size = 0x4, scoped, tag = 'scoped memory for tpu_custom_call.1']
    #allocation7 [shape = 'u8[32768]{0}', space=vmem, size = 0x8000, scoped, tag = 'input window, operand 1, single buffered']
    #allocation8 [shape = 's32[1]{0}', space=sflag, size = 0x4, scoped, tag = 'scoped memory for tpu_custom_call.1']
    #allocation9 [shape = 'u8[262144]{0}', space=vmem, size = 0x40000, scoped, tag = 'input window, operand 2, single buffered']
    #allocation10 [shape = 'u8[65536]{0}', space=vmem, size = 0x10000, scoped, tag = 'input window, operand 4, single buffered']
    #allocation11 [shape = 's32[1]{0}', space=sflag, size = 0x4, scoped, tag = 'scoped memory for tpu_custom_call.1']
    #allocation12 [shape = 'u8[4096]{0}', space=vmem, size = 0x1000, scoped, tag = 'output window, operand 0, single buffered']
    %11 = vsyncpa [#allocation5], 0
    %12 = vsyncpa [#allocation8], 0
    %13 = vsyncpa [#allocation11], 0
    %14 = vsyncpa [#allocation6], 0
    // Predicated region
    $region2: #{tpu_custom_call.1} parent=1 // pred_check
      _
    $region3: #{tpu_custom_call.1} parent=1 // pred_check_branch
      %16 = sbr.rel (0) target = $region5
    $region4: #{tpu_custom_call.1} parent=1 // pred_region
      %s18 = ssub.s32 128, 128
      %19 = vsyncadd [#allocation5], %s18
      %s21 = sshll.u32 [#allocation4], 4
      %s22 = int_to_ptr.vmem [resolvable:$true] %s21
      %24 = dma.hbm_to_vmem [thread:$0]  %s0, 128, %s22, [#allocation5]
    $region5: #{tpu_custom_call.1} parent=1 // pred_fallthru
      _
    // Predicated region
    $region6: #{tpu_custom_call.1} parent=1 // pred_check
      _
    $region7: #{tpu_custom_call.1} parent=1 // pred_check_branch
      %26 = sbr.rel (0) target = $region9
    $region8: #{tpu_custom_call.1} parent=1 // pred_region
      %s28 = ssub.s32 1024, 1024
      %29 = vsyncadd [#allocation8], %s28
      %s30 = sshll.u32 [#allocation7], 4
      %s31 = int_to_ptr.vmem [resolvable:$true] %s30
      %36 = dma.hbm_to_vmem [thread:$0]  %s1, 1024, %s31, [#allocation8], 512, 512, 32
    $region9: #{tpu_custom_call.1} parent=1 // pred_fallthru
      _
    // Predicated region
    $region10: #{tpu_custom_call.1} parent=1 // pred_check
      _
    $region11: #{tpu_custom_call.1} parent=1 // pred_check_branch
      %38 = sbr.rel (0) target = $region13
    $region12: #{tpu_custom_call.1} parent=1 // pred_region
      %s40 = ssub.s32 8192, 8192
      %41 = vsyncadd [#allocation8], %s40
      %s42 = sshll.u32 [#allocation9], 4
      %s43 = int_to_ptr.vmem [resolvable:$true] %s42
      %48 = dma.hbm_to_vmem [thread:$0]  %s2, 8192, %s43, [#allocation8], 512, 512, 32
    $region13: #{tpu_custom_call.1} parent=1 // pred_fallthru
      _
    // Predicated region
    $region14: #{tpu_custom_call.1} parent=1 // pred_check
      _
    $region15: #{tpu_custom_call.1} parent=1 // pred_check_branch
      %50 = sbr.rel (0) target = $region17
    $region16: #{tpu_custom_call.1} parent=1 // pred_region
      _
    $region17: #{tpu_custom_call.1} parent=1 // pred_fallthru
      _
    // Predicated region
    $region18: #{tpu_custom_call.1} parent=1 // pred_check
      _
    $region19: #{tpu_custom_call.1} parent=1 // pred_check_branch
      %52 = sbr.rel (0) target = $region21
    $region20: #{tpu_custom_call.1} parent=1 // pred_region
      %s54 = ssub.s32 2048, 2048
      %55 = vsyncadd [#allocation11], %s54
      %s56 = sshll.u32 [#allocation10], 4
      %s57 = int_to_ptr.vmem [resolvable:$true] %s56
      %62 = dma.hbm_to_vmem [thread:$0]  %s4, 2048, %s57, [#allocation11], 128, 128, 8
    $region21: #{tpu_custom_call.1} parent=1 // pred_fallthru
      _
    // Predicated region
    $region22: #{tpu_custom_call.1} parent=1 // pred_check
      _
    $region23: #{tpu_custom_call.1} parent=1 // pred_check_branch
      %64 = sbr.rel (0) target = $region25
    $region24: #{tpu_custom_call.1} parent=1 // pred_region
      _
    $region25: #{tpu_custom_call.1} parent=1 // pred_fallthru
      _
    // Predicated region
    $region26: #{tpu_custom_call.1} parent=1 // pred_check
      _
    $region27: #{tpu_custom_call.1} parent=1 // pred_check_branch
      %66 = sbr.rel (0) target = $region29
    $region28: #{tpu_custom_call.1} parent=1 // pred_region
      %67 = dma.done [#allocation5], 128
    $region29: #{tpu_custom_call.1} parent=1 // pred_fallthru
      _
    // Predicated region
    $region30: #{tpu_custom_call.1} parent=1 // pred_check
      _
    $region31: #{tpu_custom_call.1} parent=1 // pred_check_branch
      %69 = sbr.rel (0) target = $region33
    $region32: #{tpu_custom_call.1} parent=1 // pred_region
      %70 = dma.done [#allocation8], 1024
    $region33: #{tpu_custom_call.1} parent=1 // pred_fallthru
      _
    // Predicated region
    $region34: #{tpu_custom_call.1} parent=1 // pred_check
      _
    $region35: #{tpu_custom_call.1} parent=1 // pred_check_branch
      %72 = sbr.rel (0) target = $region37
    $region36: #{tpu_custom_call.1} parent=1 // pred_region
      %73 = dma.done [#allocation8], 8192
    $region37: #{tpu_custom_call.1} parent=1 // pred_fallthru
      _
    // Predicated region
    $region38: #{tpu_custom_call.1} parent=1 // pred_check
      _
    $region39: #{tpu_custom_call.1} parent=1 // pred_check_branch
      %75 = sbr.rel (0) target = $region41
    $region40: #{tpu_custom_call.1} parent=1 // pred_region
      %76 = dma.done [#allocation11], 2048
    $region41: #{tpu_custom_call.1} parent=1 // pred_fallthru
      _
    %v77 = vld [vmem:[#allocation4] sm:$0xff]
    %v78 = vld [vmem:[#allocation7] sm:$0xff]
    %v79 = vld [vmem:[#allocation7 + $0x8] sm:$0xff]
    %v80 = vld [vmem:[#allocation7 + $0x10] sm:$0xff]
    %v81 = vld [vmem:[#allocation7 + $0x18] sm:$0xff]
    %v82 = vld [vmem:[#allocation7 + $0x20] sm:$0x3]
    %v83 = vld [vmem:[#allocation7 + $0x28] sm:$0x3]
    %v84 = vld [vmem:[#allocation7 + $0x30] sm:$0x3]
    %v85 = vld [vmem:[#allocation7 + $0x38] sm:$0x3]
    %v86 = vld [vmem:[%s3] sm:$0xf]
    %v88 = vlaneseq
    %v89 = vshrl.u32 %v88, 7
    %v90 = vsub.s32 0, %v89
    %v91 = vrot.slane %v86, %v90
    %v92 = vlaneseq
    %v93 = vshrl.u32 %v92, 7
    %v94 = vsub.s32 1, %v93
    %v95 = vrot.slane %v86, %v94
    %v96 = vlaneseq
    %v97 = vshrl.u32 %v96, 7
    %v98 = vsub.s32 2, %v97
    %v99 = vrot.slane %v86, %v98
    %v100 = vlaneseq
    %v101 = vshrl.u32 %v100, 7
    %v102 = vsub.s32 3, %v101
    %v103 = vrot.slane %v86, %v102
    %vm108 = vcmask 80896
    %v110 = vsel %vm108, %v77, 0
    %vm112 = vcmask 1041408
    %v114 = vsel %vm112, %v82, 0
    %v117 = vsel %vm112, %v83, 0
    %v120 = vsel %vm112, %v84, 0
    %v123 = vsel %vm112, %v85, 0
    %125 = vmatprep.subr.mxu0 %v79
    %126 = vmatpush1.msra.mxu0 %v78
    %127 = vmatprep.subr.mxu0 %v117
    %128 = vmatpush1.msra.mxu0 %v114
    %129 = vmatprep.subr.mxu0 0.0
    %130 = vmatpush1.msra.mxu0 0.0
    %131 = vmatprep.subr.mxu0 0.0
    %132 = vmatpush1.msra.mxu0 0.0
    %133 = vmatprep.subr.mxu0 0.0
    %134 = vmatpush1.msra.mxu0 0.0
    %135 = vmatprep.subr.mxu0 0.0
    %136 = vmatpush1.msra.mxu0 0.0
    %137 = vmatprep.subr.mxu0 0.0
    %138 = vmatpush1.msra.mxu0 0.0
    %139 = vmatprep.subr.mxu0 0.0
    %140 = vmatpush1.msra.mxu0 0.0
    %141 = vmatprep.subr.mxu0 0.0
    %142 = vmatpush1.msra.mxu0 0.0
    %143 = vmatprep.subr.mxu0 0.0
    %144 = vmatpush1.msra.mxu0 0.0
    %145 = vmatprep.subr.mxu0 0.0
    %146 = vmatpush1.msra.mxu0 0.0
    %147 = vmatprep.subr.mxu0 0.0
    %148 = vmatpush1.msra.mxu0 0.0
    %149 = vmatprep.subr.mxu0 0.0
    %150 = vmatpush1.msra.mxu0 0.0
    %151 = vmatprep.subr.mxu0 0.0
    %152 = vmatpush1.msra.mxu0 0.0
    %153 = vmatprep.subr.mxu0 0.0
    %154 = vmatpush1.msra.mxu0 0.0
    %155 = vmatprep.subr.mxu0 0.0
    %156 = vmatpush1.msra.mxu0 0.0
    %157 = vmatprep.subr.mxu0 0.0
    %158 = vmatpush1.msra.mxu0 0.0
    %159 = vmatprep.subr.mxu0 0.0
    %160 = vmatpush1.msra.mxu0 0.0
    %161 = vmatprep.subr.mxu0 0.0
    %162 = vmatpush1.msra.mxu0 0.0
    %163 = vmatprep.subr.mxu0 0.0
    %164 = vmatpush1.msra.mxu0 0.0
    %165 = vmatprep.subr.mxu0 0.0
    %166 = vmatpush1.msra.mxu0 0.0
    %167 = vmatprep.subr.mxu0 0.0
    %168 = vmatpush1.msra.mxu0 0.0
    %169 = vmatprep.subr.mxu0 0.0
    %170 = vmatpush1.msra.mxu0 0.0
    %171 = vmatprep.subr.mxu0 0.0
    %172 = vmatpush1.msra.mxu0 0.0
    %173 = vmatprep.subr.mxu0 0.0
    %174 = vmatpush1.msra.mxu0 0.0
    %175 = vmatprep.subr.mxu0 0.0
    %176 = vmatpush1.msra.mxu0 0.0
    %177 = vmatprep.subr.mxu0 0.0
    %178 = vmatpush1.msra.mxu0 0.0
    %179 = vmatprep.subr.mxu0 0.0
    %180 = vmatpush1.msra.mxu0 0.0
    %181 = vmatprep.subr.mxu0 0.0
    %182 = vmatpush1.msra.mxu0 0.0
    %183 = vmatprep.subr.mxu0 0.0
    %184 = vmatpush1.msra.mxu0 0.0
    %185 = vmatprep.subr.mxu0 0.0
    %186 = vmatpush1.msra.mxu0 0.0
    %187 = vmatprep.subr.mxu0 0.0
    %188 = vmatpush1.msra.mxu0 0.0
    %189 = vmatprep.mubr.f32.mxu0 0.0
    %190 = vmatmul.mubr.f32.gmra.mrb[0].mxu0 %v110
    %v191 = vpop.f32.mrb[0].mxu0
    %v192 = vadd.f32 %v91, %v191
    %v193 = vpop.f32.mrb[0].mxu0
    %v194 = vadd.f32 %v95, %v193
    %195 = vdwg.mxu0
    %196 = vmatprep.subr.mxu0 %v81
    %197 = vmatpush1.msra.mxu0 %v80
    %198 = vmatprep.subr.mxu0 %v123
    %199 = vmatpush1.msra.mxu0 %v120
    %200 = vmatprep.subr.mxu0 0.0
    %201 = vmatpush1.msra.mxu0 0.0
    %202 = vmatprep.subr.mxu0 0.0
    %203 = vmatpush1.msra.mxu0 0.0
    %204 = vmatprep.subr.mxu0 0.0
    %205 = vmatpush1.msra.mxu0 0.0
    %206 = vmatprep.subr.mxu0 0.0
    %207 = vmatpush1.msra.mxu0 0.0
    %208 = vmatprep.subr.mxu0 0.0
    %209 = vmatpush1.msra.mxu0 0.0
    %210 = vmatprep.subr.mxu0 0.0
    %211 = vmatpush1.msra.mxu0 0.0
    %212 = vmatprep.subr.mxu0 0.0
    %213 = vmatpush1.msra.mxu0 0.0
    %214 = vmatprep.subr.mxu0 0.0
    %215 = vmatpush1.msra.mxu0 0.0
    %216 = vmatprep.subr.mxu0 0.0
    %217 = vmatpush1.msra.mxu0 0.0
    %218 = vmatprep.subr.mxu0 0.0
    %219 = vmatpush1.msra.mxu0 0.0
    %220 = vmatprep.subr.mxu0 0.0
    %221 = vmatpush1.msra.mxu0 0.0
    %222 = vmatprep.subr.mxu0 0.0
    %223 = vmatpush1.msra.mxu0 0.0
    %224 = vmatprep.subr.mxu0 0.0
    %225 = vmatpush1.msra.mxu0 0.0
    %226 = vmatprep.subr.mxu0 0.0
    %227 = vmatpush1.msra.mxu0 0.0
    %228 = vmatprep.subr.mxu0 0.0
    %229 = vmatpush1.msra.mxu0 0.0
    %230 = vmatprep.subr.mxu0 0.0
    %231 = vmatpush1.msra.mxu0 0.0
    %232 = vmatprep.subr.mxu0 0.0
    %233 = vmatpush1.msra.mxu0 0.0
    %234 = vmatprep.subr.mxu0 0.0
    %235 = vmatpush1.msra.mxu0 0.0
    %236 = vmatprep.subr.mxu0 0.0
    %237 = vmatpush1.msra.mxu0 0.0
    %238 = vmatprep.subr.mxu0 0.0
    %239 = vmatpush1.msra.mxu0 0.0
    %240 = vmatprep.subr.mxu0 0.0
    %241 = vmatpush1.msra.mxu0 0.0
    %242 = vmatprep.subr.mxu0 0.0
    %243 = vmatpush1.msra.mxu0 0.0
    %244 = vmatprep.subr.mxu0 0.0
    %245 = vmatpush1.msra.mxu0 0.0
    %246 = vmatprep.subr.mxu0 0.0
    %247 = vmatpush1.msra.mxu0 0.0
    %248 = vmatprep.subr.mxu0 0.0
    %249 = vmatpush1.msra.mxu0 0.0
    %250 = vmatprep.subr.mxu0 0.0
    %251 = vmatpush1.msra.mxu0 0.0
    %252 = vmatprep.subr.mxu0 0.0
    %253 = vmatpush1.msra.mxu0 0.0
    %254 = vmatprep.subr.mxu0 0.0
    %255 = vmatpush1.msra.mxu0 0.0
    %256 = vmatprep.subr.mxu0 0.0
    %257 = vmatpush1.msra.mxu0 0.0
    %258 = vmatprep.subr.mxu0 0.0
    %259 = vmatpush1.msra.mxu0 0.0
    %260 = vmatprep.mubr.f32.mxu0 0.0
    %261 = vmatmul.mubr.f32.gmra.mrb[0].mxu0 %v110
    %v262 = vpop.f32.mrb[0].mxu0
    %v263 = vadd.f32 %v99, %v262
    %v264 = vpop.f32.mrb[0].mxu0
    %v265 = vadd.f32 %v103, %v264
    %266 = vdwg.mxu0
    %267 = vst [vmem:[#allocation2] sm:$0xff] %v192
    %268 = vst [vmem:[#allocation2 + $0x8] sm:$0xff] %v194
    %269 = vst [vmem:[#allocation2 + $0x10] sm:$0xff] %v263
    %270 = vst [vmem:[#allocation2 + $0x18] sm:$0xff] %v265
    %v271 = vld [vmem:[#allocation9] sm:$0xff]
    %v272 = vld [vmem:[#allocation9 + $0x8] sm:$0xff]
    %v273 = vld [vmem:[#allocation9 + $0x10] sm:$0xff]
    %v274 = vld [vmem:[#allocation9 + $0x18] sm:$0xff]
    %v275 = vld [vmem:[#allocation9 + $0x20] sm:$0xff]
    %v276 = vld [vmem:[#allocation9 + $0x28] sm:$0xff]
    %v277 = vld [vmem:[#allocation9 + $0x30] sm:$0xff]
    %v278 = vld [vmem:[#allocation9 + $0x38] sm:$0xff]
    %v279 = vld [vmem:[#allocation9 + $0x40] sm:$0xff]
    %v280 = vld [vmem:[#allocation9 + $0x48] sm:$0xff]
    %v281 = vld [vmem:[#allocation9 + $0x50] sm:$0xff]
    %v282 = vld [vmem:[#allocation9 + $0x58] sm:$0xff]
    %v283 = vld [vmem:[#allocation9 + $0x60] sm:$0xff]
    %v284 = vld [vmem:[#allocation9 + $0x68] sm:$0xff]
    %v285 = vld [vmem:[#allocation9 + $0x70] sm:$0xff]
    %v286 = vld [vmem:[#allocation9 + $0x78] sm:$0xff]
    %v287 = vld [vmem:[#allocation9 + $0x80] sm:$0xff]
    %v288 = vld [vmem:[#allocation9 + $0x88] sm:$0xff]
    %v289 = vld [vmem:[#allocation9 + $0x90] sm:$0xff]
    %v290 = vld [vmem:[#allocation9 + $0x98] sm:$0xff]
    %v291 = vld [vmem:[#allocation9 + $0xa0] sm:$0xff]
    %v292 = vld [vmem:[#allocation9 + $0xa8] sm:$0xff]
    %v293 = vld [vmem:[#allocation9 + $0xb0] sm:$0xff]
    %v294 = vld [vmem:[#allocation9 + $0xb8] sm:$0xff]
    %v295 = vld [vmem:[#allocation9 + $0xc0] sm:$0xff]
    %v296 = vld [vmem:[#allocation9 + $0xc8] sm:$0xff]
    %v297 = vld [vmem:[#allocation9 + $0xd0] sm:$0xff]
    %v298 = vld [vmem:[#allocation9 + $0xd8] sm:$0xff]
    %v299 = vld [vmem:[#allocation9 + $0xe0] sm:$0xff]
    %v300 = vld [vmem:[#allocation9 + $0xe8] sm:$0xff]
    %v301 = vld [vmem:[#allocation9 + $0xf0] sm:$0xff]
    %v302 = vld [vmem:[#allocation9 + $0xf8] sm:$0xff]
    %v303 = vld [vmem:[#allocation9 + $0x100] sm:$0xff]
    %v304 = vld [vmem:[#allocation9 + $0x108] sm:$0xff]
    %v305 = vld [vmem:[#allocation9 + $0x110] sm:$0xff]
    %v306 = vld [vmem:[#allocation9 + $0x118] sm:$0xff]
    %v307 = vld [vmem:[#allocation9 + $0x120] sm:$0xff]
    %v308 = vld [vmem:[#allocation9 + $0x128] sm:$0xff]
    %v309 = vld [vmem:[#allocation9 + $0x130] sm:$0xff]
    %v310 = vld [vmem:[#allocation9 + $0x138] sm:$0xff]
    %v311 = vld [vmem:[#allocation9 + $0x140] sm:$0xff]
    %v312 = vld [vmem:[#allocation9 + $0x148] sm:$0xff]
    %v313 = vld [vmem:[#allocation9 + $0x150] sm:$0xff]
    %v314 = vld [vmem:[#allocation9 + $0x158] sm:$0xff]
    %v315 = vld [vmem:[#allocation9 + $0x160] sm:$0xff]
    %v316 = vld [vmem:[#allocation9 + $0x168] sm:$0xff]
    %v317 = vld [vmem:[#allocation9 + $0x170] sm:$0xff]
    %v318 = vld [vmem:[#allocation9 + $0x178] sm:$0xff]
    %v319 = vld [vmem:[#allocation9 + $0x180] sm:$0xff]
    %v320 = vld [vmem:[#allocation9 + $0x188] sm:$0xff]
    %v321 = vld [vmem:[#allocation9 + $0x190] sm:$0xff]
    %v322 = vld [vmem:[#allocation9 + $0x198] sm:$0xff]
    %v323 = vld [vmem:[#allocation9 + $0x1a0] sm:$0xff]
    %v324 = vld [vmem:[#allocation9 + $0x1a8] sm:$0xff]
    %v325 = vld [vmem:[#allocation9 + $0x1b0] sm:$0xff]
    %v326 = vld [vmem:[#allocation9 + $0x1b8] sm:$0xff]
    %v327 = vld [vmem:[#allocation9 + $0x1c0] sm:$0xff]
    %v328 = vld [vmem:[#allocation9 + $0x1c8] sm:$0xff]
    %v329 = vld [vmem:[#allocation9 + $0x1d0] sm:$0xff]
    %v330 = vld [vmem:[#allocation9 + $0x1d8] sm:$0xff]
    %v331 = vld [vmem:[#allocation9 + $0x1e0] sm:$0xff]
    %v332 = vld [vmem:[#allocation9 + $0x1e8] sm:$0xff]
    %v333 = vld [vmem:[#allocation9 + $0x1f0] sm:$0xff]
    %v334 = vld [vmem:[#allocation9 + $0x1f8] sm:$0xff]
    %v335 = vld [vmem:[#allocation2] ss:$8 sm:$0xf]
    %336 = vmatprep.subr.mxu0 %v272
    %337 = vmatpush1.msra.mxu0 %v271
    %338 = vmatprep.subr.mxu0 %v276
    %339 = vmatpush1.msra.mxu0 %v275
    %340 = vmatprep.subr.mxu0 %v280
    %341 = vmatpush1.msra.mxu0 %v279
    %342 = vmatprep.subr.mxu0 %v284
    %343 = vmatpush1.msra.mxu0 %v283
    %344 = vmatprep.subr.mxu0 %v288
    %345 = vmatpush1.msra.mxu0 %v287
    %346 = vmatprep.subr.mxu0 %v292
    %347 = vmatpush1.msra.mxu0 %v291
    %348 = vmatprep.subr.mxu0 %v296
    %349 = vmatpush1.msra.mxu0 %v295
    %350 = vmatprep.subr.mxu0 %v300
    %351 = vmatpush1.msra.mxu0 %v299
    %352 = vmatprep.subr.mxu0 %v304
    %353 = vmatpush1.msra.mxu0 %v303
    %354 = vmatprep.subr.mxu0 %v308
    %355 = vmatpush1.msra.mxu0 %v307
    %356 = vmatprep.subr.mxu0 %v312
    %357 = vmatpush1.msra.mxu0 %v311
    %358 = vmatprep.subr.mxu0 %v316
    %359 = vmatpush1.msra.mxu0 %v315
    %360 = vmatprep.subr.mxu0 %v320
    %361 = vmatpush1.msra.mxu0 %v319
    %362 = vmatprep.subr.mxu0 %v324
    %363 = vmatpush1.msra.mxu0 %v323
    %364 = vmatprep.subr.mxu0 %v328
    %365 = vmatpush1.msra.mxu0 %v327
    %366 = vmatprep.subr.mxu0 %v332
    %367 = vmatpush1.msra.mxu0 %v331
    %368 = vmatprep.subr.mxu0 0.0
    %369 = vmatpush1.msra.mxu0 0.0
    %370 = vmatprep.subr.mxu0 0.0
    %371 = vmatpush1.msra.mxu0 0.0
    %372 = vmatprep.subr.mxu0 0.0
    %373 = vmatpush1.msra.mxu0 0.0
    %374 = vmatprep.subr.mxu0 0.0
    %375 = vmatpush1.msra.mxu0 0.0
    %376 = vmatprep.subr.mxu0 0.0
    %377 = vmatpush1.msra.mxu0 0.0
    %378 = vmatprep.subr.mxu0 0.0
    %379 = vmatpush1.msra.mxu0 0.0
    %380 = vmatprep.subr.mxu0 0.0
    %381 = vmatpush1.msra.mxu0 0.0
    %382 = vmatprep.subr.mxu0 0.0
    %383 = vmatpush1.msra.mxu0 0.0
    %384 = vmatprep.subr.mxu0 0.0
    %385 = vmatpush1.msra.mxu0 0.0
    %386 = vmatprep.subr.mxu0 0.0
    %387 = vmatpush1.msra.mxu0 0.0
    %388 = vmatprep.subr.mxu0 0.0
    %389 = vmatpush1.msra.mxu0 0.0
    %390 = vmatprep.subr.mxu0 0.0
    %391 = vmatpush1.msra.mxu0 0.0
    %392 = vmatprep.subr.mxu0 0.0
    %393 = vmatpush1.msra.mxu0 0.0
    %394 = vmatprep.subr.mxu0 0.0
    %395 = vmatpush1.msra.mxu0 0.0
    %396 = vmatprep.subr.mxu0 0.0
    %397 = vmatpush1.msra.mxu0 0.0
    %398 = vmatprep.subr.mxu0 0.0
    %399 = vmatpush1.msra.mxu0 0.0
    %400 = vmatprep.mubr.f32.mxu0 0.0
    %401 = vmatmul.mubr.f32.gmra.mrb[0].mxu0 0.0
    %v402 = vpop.f32.mrb[0].mxu0
    %v403 = vadd.f32 0.0, %v402
    %v404 = vpop.f32.mrb[0].mxu0
    %v405 = vadd.f32 0.0, %v404
    %406 = vdwg.mxu0
    %407 = vmatprep.subr.mxu0 %v274
    %408 = vmatpush1.msra.mxu0 %v273
    %409 = vmatprep.subr.mxu0 %v278
    %410 = vmatpush1.msra.mxu0 %v277
    %411 = vmatprep.subr.mxu0 %v282
    %412 = vmatpush1.msra.mxu0 %v281
    %413 = vmatprep.subr.mxu0 %v286
    %414 = vmatpush1.msra.mxu0 %v285
    %415 = vmatprep.subr.mxu0 %v290
    %416 = vmatpush1.msra.mxu0 %v289
    %417 = vmatprep.subr.mxu0 %v294
    %418 = vmatpush1.msra.mxu0 %v293
    %419 = vmatprep.subr.mxu0 %v298
    %420 = vmatpush1.msra.mxu0 %v297
    %421 = vmatprep.subr.mxu0 %v302
    %422 = vmatpush1.msra.mxu0 %v301
    %423 = vmatprep.subr.mxu0 %v306
    %424 = vmatpush1.msra.mxu0 %v305
    %425 = vmatprep.subr.mxu0 %v310
    %426 = vmatpush1.msra.mxu0 %v309
    %427 = vmatprep.subr.mxu0 %v314
    %428 = vmatpush1.msra.mxu0 %v313
    %429 = vmatprep.subr.mxu0 %v318
    %430 = vmatpush1.msra.mxu0 %v317
    %431 = vmatprep.subr.mxu0 %v322
    %432 = vmatpush1.msra.mxu0 %v321
    %433 = vmatprep.subr.mxu0 %v326
    %434 = vmatpush1.msra.mxu0 %v325
    %435 = vmatprep.subr.mxu0 %v330
    %436 = vmatpush1.msra.mxu0 %v329
    %437 = vmatprep.subr.mxu0 %v334
    %438 = vmatpush1.msra.mxu0 %v333
    %439 = vmatprep.subr.mxu0 0.0
    %440 = vmatpush1.msra.mxu0 0.0
    %441 = vmatprep.subr.mxu0 0.0
    %442 = vmatpush1.msra.mxu0 0.0
    %443 = vmatprep.subr.mxu0 0.0
    %444 = vmatpush1.msra.mxu0 0.0
    %445 = vmatprep.subr.mxu0 0.0
    %446 = vmatpush1.msra.mxu0 0.0
    %447 = vmatprep.subr.mxu0 0.0
    %448 = vmatpush1.msra.mxu0 0.0
    %449 = vmatprep.subr.mxu0 0.0
    %450 = vmatpush1.msra.mxu0 0.0
    %451 = vmatprep.subr.mxu0 0.0
    %452 = vmatpush1.msra.mxu0 0.0
    %453 = vmatprep.subr.mxu0 0.0
    %454 = vmatpush1.msra.mxu0 0.0
    %455 = vmatprep.subr.mxu0 0.0
    %456 = vmatpush1.msra.mxu0 0.0
    %457 = vmatprep.subr.mxu0 0.0
    %458 = vmatpush1.msra.mxu0 0.0
    %459 = vmatprep.subr.mxu0 0.0
    %460 = vmatpush1.msra.mxu0 0.0
    %461 = vmatprep.subr.mxu0 0.0
    %462 = vmatpush1.msra.mxu0 0.0
    %463 = vmatprep.subr.mxu0 0.0
    %464 = vmatpush1.msra.mxu0 0.0
    %465 = vmatprep.subr.mxu0 0.0
    %466 = vmatpush1.msra.mxu0 0.0
    %467 = vmatprep.subr.mxu0 0.0
    %468 = vmatpush1.msra.mxu0 0.0
    %469 = vmatprep.subr.mxu0 0.0
    %470 = vmatpush1.msra.mxu0 0.0
    %471 = vmatprep.mubr.f32.mxu0 0.0
    %472 = vmatmul.mubr.f32.gmra.mrb[0].mxu0 0.0
    %v473 = vpop.f32.mrb[0].mxu0
    %v474 = vadd.f32 0.0, %v473
    %v475 = vpop.f32.mrb[0].mxu0
    %v476 = vadd.f32 0.0, %v475
    %477 = vdwg.mxu0
    %v482 = vcombine.low %v403, %v405
    %v483 = vcombine.low %v474, %v476
    %v485 = vunpack.c.l.s4 1966171168
    %v486 = vunpack.c.0.s8 %v485
    %v487 = vlaneseq
    %v488 = vshrl.u32 %v487, 7
    %v489 = vsub.s32 %v486, %v488
    %v490 = vrot.slane %v482, %v489
    %v492 = vunpack.c.l.s4 1966171168
    %v493 = vunpack.c.0.s8 %v492
    %v494 = vlaneseq
    %v495 = vshrl.u32 %v494, 7
    %v496 = vsub.s32 %v493, %v495
    %v497 = vrot.slane %v483, %v496
    %v498 = vcombine.low %v490, %v497
    %v500 = vunpack.c.l.s4 1966171168
    %v501 = vunpack.c.0.s8 %v500
    %v502 = vlaneseq
    %v503 = vshrl.u32 %v502, 7
    %v504 = vsub.s32 %v501, %v503
    %v505 = vrot.slane %v498, %v504
    %v507 = vadd.f32 %v335, %v505
    %v508 = vtanh.pop %v507
    %v509 = vmul.f32 %v508, 0.5
    %v510 = vadd.f32 %v509, 0.5
    %v512 = vrot.slane %v507, 1
    %v514 = vtanh.pop %v512
    %v515 = vmul.f32 %v514, 0.5
    %v516 = vadd.f32 %v515, 0.5
    %v517 = vrot.slane %v507, 2
    %v519 = vtanh.pop %v517
    %v520 = vrot.slane %v507, 3
    %v522 = vtanh.pop %v520
    %v523 = vmul.f32 %v522, 0.5
    %v524 = vadd.f32 %v523, 0.5
    %v525 = vmul.f32 %v516, 0.0
    %v526 = vmul.f32 %v510, %v519
    %v527 = vadd.f32 %v525, %v526
    %v528 = vtanh.pop %v527
    %v529 = vmul.f32 %v524, %v528
    %530 = vst [vmem:[#allocation3] sm:$0x1] %v529
    %s531 = scalar_lea.vmem [#allocation2], 1
    %v532 = vld [vmem:[%s531] ss:$8 sm:$0xf]
    %533 = vmatprep.subr.mxu0 %v272
    %534 = vmatpush1.msra.mxu0 %v271
    %535 = vmatprep.subr.mxu0 %v276
    %536 = vmatpush1.msra.mxu0 %v275
    %537 = vmatprep.subr.mxu0 %v280
    %538 = vmatpush1.msra.mxu0 %v279
    %539 = vmatprep.subr.mxu0 %v284
    %540 = vmatpush1.msra.mxu0 %v283
    %541 = vmatprep.subr.mxu0 %v288
    %542 = vmatpush1.msra.mxu0 %v287
    %543 = vmatprep.subr.mxu0 %v292
    %544 = vmatpush1.msra.mxu0 %v291
    %545 = vmatprep.subr.mxu0 %v296
    %546 = vmatpush1.msra.mxu0 %v295
    %547 = vmatprep.subr.mxu0 %v300
    %548 = vmatpush1.msra.mxu0 %v299
    %549 = vmatprep.subr.mxu0 %v304
    %550 = vmatpush1.msra.mxu0 %v303
    %551 = vmatprep.subr.mxu0 %v308
    %552 = vmatpush1.msra.mxu0 %v307
    %553 = vmatprep.subr.mxu0 %v312
    %554 = vmatpush1.msra.mxu0 %v311
    %555 = vmatprep.subr.mxu0 %v316
    %556 = vmatpush1.msra.mxu0 %v315
    %557 = vmatprep.subr.mxu0 %v320
    %558 = vmatpush1.msra.mxu0 %v319
    %559 = vmatprep.subr.mxu0 %v324
    %560 = vmatpush1.msra.mxu0 %v323
    %561 = vmatprep.subr.mxu0 %v328
    %562 = vmatpush1.msra.mxu0 %v327
    %563 = vmatprep.subr.mxu0 %v332
    %564 = vmatpush1.msra.mxu0 %v331
    %565 = vmatprep.subr.mxu0 0.0
    %566 = vmatpush1.msra.mxu0 0.0
    %567 = vmatprep.subr.mxu0 0.0
    %568 = vmatpush1.msra.mxu0 0.0
    %569 = vmatprep.subr.mxu0 0.0
    %570 = vmatpush1.msra.mxu0 0.0
    %571 = vmatprep.subr.mxu0 0.0
    %572 = vmatpush1.msra.mxu0 0.0
    %573 = vmatprep.subr.mxu0 0.0
    %574 = vmatpush1.msra.mxu0 0.0
    %575 = vmatprep.subr.mxu0 0.0
    %576 = vmatpush1.msra.mxu0 0.0
    %577 = vmatprep.subr.mxu0 0.0
    %578 = vmatpush1.msra.mxu0 0.0
    %579 = vmatprep.subr.mxu0 0.0
    %580 = vmatpush1.msra.mxu0 0.0
    %581 = vmatprep.subr.mxu0 0.0
    %582 = vmatpush1.msra.mxu0 0.0
    %583 = vmatprep.subr.mxu0 0.0
    %584 = vmatpush1.msra.mxu0 0.0
    %585 = vmatprep.subr.mxu0 0.0
    %586 = vmatpush1.msra.mxu0 0.0
    %587 = vmatprep.subr.mxu0 0.0
    %588 = vmatpush1.msra.mxu0 0.0
    %589 = vmatprep.subr.mxu0 0.0
    %590 = vmatpush1.msra.mxu0 0.0
    %591 = vmatprep.subr.mxu0 0.0
    %592 = vmatpush1.msra.mxu0 0.0
    %593 = vmatprep.subr.mxu0 0.0
    %594 = vmatpush1.msra.mxu0 0.0
    %595 = vmatprep.subr.mxu0 0.0
    %596 = vmatpush1.msra.mxu0 0.0
    %597 = vmatprep.mubr.f32.mxu0 0.0
    %598 = vmatmul.mubr.f32.gmra.mrb[0].mxu0 %v529
    %v599 = vpop.f32.mrb[0].mxu0
    %v600 = vadd.f32 0.0, %v599
    %v601 = vpop.f32.mrb[0].mxu0
    %v602 = vadd.f32 0.0, %v601
    %603 = vdwg.mxu0
    %604 = vmatprep.subr.mxu0 %v274
    %605 = vmatpush1.msra.mxu0 %v273
    %606 = vmatprep.subr.mxu0 %v278
    %607 = vmatpush1.msra.mxu0 %v277
    %608 = vmatprep.subr.mxu0 %v282
    %609 = vmatpush1.msra.mxu0 %v281
    %610 = vmatprep.subr.mxu0 %v286
    %611 = vmatpush1.msra.mxu0 %v285
    %612 = vmatprep.subr.mxu0 %v290
    %613 = vmatpush1.msra.mxu0 %v289
    %614 = vmatprep.subr.mxu0 %v294
    %615 = vmatpush1.msra.mxu0 %v293
    %616 = vmatprep.subr.mxu0 %v298
    %617 = vmatpush1.msra.mxu0 %v297
    %618 = vmatprep.subr.mxu0 %v302
    %619 = vmatpush1.msra.mxu0 %v301
    %620 = vmatprep.subr.mxu0 %v306
    %621 = vmatpush1.msra.mxu0 %v305
    %622 = vmatprep.subr.mxu0 %v310
    %623 = vmatpush1.msra.mxu0 %v309
    %624 = vmatprep.subr.mxu0 %v314
    %625 = vmatpush1.msra.mxu0 %v313
    %626 = vmatprep.subr.mxu0 %v318
    %627 = vmatpush1.msra.mxu0 %v317
    %628 = vmatprep.subr.mxu0 %v322
    %629 = vmatpush1.msra.mxu0 %v321
    %630 = vmatprep.subr.mxu0 %v326
    %631 = vmatpush1.msra.mxu0 %v325
    %632 = vmatprep.subr.mxu0 %v330
    %633 = vmatpush1.msra.mxu0 %v329
    %634 = vmatprep.subr.mxu0 %v334
    %635 = vmatpush1.msra.mxu0 %v333
    %636 = vmatprep.subr.mxu0 0.0
    %637 = vmatpush1.msra.mxu0 0.0
    %638 = vmatprep.subr.mxu0 0.0
    %639 = vmatpush1.msra.mxu0 0.0
    %640 = vmatprep.subr.mxu0 0.0
    %641 = vmatpush1.msra.mxu0 0.0
    %642 = vmatprep.subr.mxu0 0.0
    %643 = vmatpush1.msra.mxu0 0.0
    %644 = vmatprep.subr.mxu0 0.0
    %645 = vmatpush1.msra.mxu0 0.0
    %646 = vmatprep.subr.mxu0 0.0
    %647 = vmatpush1.msra.mxu0 0.0
    %648 = vmatprep.subr.mxu0 0.0
    %649 = vmatpush1.msra.mxu0 0.0
    %650 = vmatprep.subr.mxu0 0.0
    %651 = vmatpush1.msra.mxu0 0.0
    %652 = vmatprep.subr.mxu0 0.0
    %653 = vmatpush1.msra.mxu0 0.0
    %654 = vmatprep.subr.mxu0 0.0
    %655 = vmatpush1.msra.mxu0 0.0
    %656 = vmatprep.subr.mxu0 0.0
    %657 = vmatpush1.msra.mxu0 0.0
    %658 = vmatprep.subr.mxu0 0.0
    %659 = vmatpush1.msra.mxu0 0.0
    %660 = vmatprep.subr.mxu0 0.0
    %661 = vmatpush1.msra.mxu0 0.0
    %662 = vmatprep.subr.mxu0 0.0
    %663 = vmatpush1.msra.mxu0 0.0
    %664 = vmatprep.subr.mxu0 0.0
    %665 = vmatpush1.msra.mxu0 0.0
    %666 = vmatprep.subr.mxu0 0.0
    %667 = vmatpush1.msra.mxu0 0.0
    %668 = vmatprep.mubr.f32.mxu0 0.0
    %669 = vmatmul.mubr.f32.gmra.mrb[0].mxu0 %v529
    %v670 = vpop.f32.mrb[0].mxu0
    %v671 = vadd.f32 0.0, %v670
    %v672 = vpop.f32.mrb[0].mxu0
    %v673 = vadd.f32 0.0, %v672
    %674 = vdwg.mxu0
    %v679 = vcombine.low %v600, %v602
    %v680 = vcombine.low %v671, %v673
    %v682 = vunpack.c.l.s4 1966171168
    %v683 = vunpack.c.0.s8 %v682
    %v684 = vlaneseq
    %v685 = vshrl.u32 %v684, 7
    %v686 = vsub.s32 %v683, %v685
    %v687 = vrot.slane %v679, %v686
    %v689 = vunpack.c.l.s4 1966171168
    %v690 = vunpack.c.0.s8 %v689
    %v691 = vlaneseq
    %v692 = vshrl.u32 %v691, 7
    %v693 = vsub.s32 %v690, %v692
    %v694 = vrot.slane %v680, %v693
    %v695 = vcombine.low %v687, %v694
    %v697 = vunpack.c.l.s4 1966171168
    %v698 = vunpack.c.0.s8 %v697
    %v699 = vlaneseq
    %v700 = vshrl.u32 %v699, 7
    %v701 = vsub.s32 %v698, %v700
    %v702 = vrot.slane %v695, %v701
    %v704 = vadd.f32 %v532, %v702
    %v705 = vtanh.pop %v704
    %v706 = vmul.f32 %v705, 0.5
    %v707 = vadd.f32 %v706, 0.5
    %v709 = vrot.slane %v704, 1
    %v711 = vtanh.pop %v709
    %v712 = vmul.f32 %v711, 0.5
    %v713 = vadd.f32 %v712, 0.5
    %v714 = vrot.slane %v704, 2
    %v716 = vtanh.pop %v714
    %v717 = vrot.slane %v704, 3
    %v719 = vtanh.pop %v717
    %v720 = vmul.f32 %v719, 0.5
    %v721 = vadd.f32 %v720, 0.5
    %v722 = vmul.f32 %v713, %v527
    %v723 = vmul.f32 %v707, %v716
    %v724 = vadd.f32 %v722, %v723
    %v725 = vtanh.pop %v724
    %v726 = vmul.f32 %v721, %v725
    %727 = vst [vmem:[#allocation3 + $0x1] sm:$0x1] %v726
    %s728 = scalar_lea.vmem [#allocation2], 2
    %v729 = vld [vmem:[%s728] ss:$8 sm:$0xf]
    %730 = vmatprep.subr.mxu0 %v272
    %731 = vmatpush1.msra.mxu0 %v271
    %732 = vmatprep.subr.mxu0 %v276
    %733 = vmatpush1.msra.mxu0 %v275
    %734 = vmatprep.subr.mxu0 %v280
    %735 = vmatpush1.msra.mxu0 %v279
    %736 = vmatprep.subr.mxu0 %v284
    %737 = vmatpush1.msra.mxu0 %v283
    %738 = vmatprep.subr.mxu0 %v288
    %739 = vmatpush1.msra.mxu0 %v287
    %740 = vmatprep.subr.mxu0 %v292
    %741 = vmatpush1.msra.mxu0 %v291
    %742 = vmatprep.subr.mxu0 %v296
    %743 = vmatpush1.msra.mxu0 %v295
    %744 = vmatprep.subr.mxu0 %v300
    %745 = vmatpush1.msra.mxu0 %v299
    %746 = vmatprep.subr.mxu0 %v304
    %747 = vmatpush1.msra.mxu0 %v303
    %748 = vmatprep.subr.mxu0 %v308
    %749 = vmatpush1.msra.mxu0 %v307
    %750 = vmatprep.subr.mxu0 %v312
    %751 = vmatpush1.msra.mxu0 %v311
    %752 = vmatprep.subr.mxu0 %v316
    %753 = vmatpush1.msra.mxu0 %v315
    %754 = vmatprep.subr.mxu0 %v320
    %755 = vmatpush1.msra.mxu0 %v319
    %756 = vmatprep.subr.mxu0 %v324
    %757 = vmatpush1.msra.mxu0 %v323
    %758 = vmatprep.subr.mxu0 %v328
    %759 = vmatpush1.msra.mxu0 %v327
    %760 = vmatprep.subr.mxu0 %v332
    %761 = vmatpush1.msra.mxu0 %v331
    %762 = vmatprep.subr.mxu0 0.0
    %763 = vmatpush1.msra.mxu0 0.0
    %764 = vmatprep.subr.mxu0 0.0
    %765 = vmatpush1.msra.mxu0 0.0
    %766 = vmatprep.subr.mxu0 0.0
    %767 = vmatpush1.msra.mxu0 0.0
    %768 = vmatprep.subr.mxu0 0.0
    %769 = vmatpush1.msra.mxu0 0.0
    %770 = vmatprep.subr.mxu0 0.0
    %771 = vmatpush1.msra.mxu0 0.0
    %772 = vmatprep.subr.mxu0 0.0
    %773 = vmatpush1.msra.mxu0 0.0
    %774 = vmatprep.subr.mxu0 0.0
    %775 = vmatpush1.msra.mxu0 0.0
    %776 = vmatprep.subr.mxu0 0.0
    %777 = vmatpush1.msra.mxu0 0.0
    %778 = vmatprep.subr.mxu0 0.0
    %779 = vmatpush1.msra.mxu0 0.0
    %780 = vmatprep.subr.mxu0 0.0
    %781 = vmatpush1.msra.mxu0 0.0
    %782 = vmatprep.subr.mxu0 0.0
    %783 = vmatpush1.msra.mxu0 0.0
    %784 = vmatprep.subr.mxu0 0.0
    %785 = vmatpush1.msra.mxu0 0.0
    %786 = vmatprep.subr.mxu0 0.0
    %787 = vmatpush1.msra.mxu0 0.0
    %788 = vmatprep.subr.mxu0 0.0
    %789 = vmatpush1.msra.mxu0 0.0
    %790 = vmatprep.subr.mxu0 0.0
    %791 = vmatpush1.msra.mxu0 0.0
    %792 = vmatprep.subr.mxu0 0.0
    %793 = vmatpush1.msra.mxu0 0.0
    %794 = vmatprep.mubr.f32.mxu0 0.0
    %795 = vmatmul.mubr.f32.gmra.mrb[0].mxu0 %v726
    %v796 = vpop.f32.mrb[0].mxu0
    %v797 = vadd.f32 0.0, %v796
    %v798 = vpop.f32.mrb[0].mxu0
    %v799 = vadd.f32 0.0, %v798
    %800 = vdwg.mxu0
    %801 = vmatprep.subr.mxu0 %v274
    %802 = vmatpush1.msra.mxu0 %v273
    %803 = vmatprep.subr.mxu0 %v278
    %804 = vmatpush1.msra.mxu0 %v277
    %805 = vmatprep.subr.mxu0 %v282
    %806 = vmatpush1.msra.mxu0 %v281
    %807 = vmatprep.subr.mxu0 %v286
    %808 = vmatpush1.msra.mxu0 %v285
    %809 = vmatprep.subr.mxu0 %v290
    %810 = vmatpush1.msra.mxu0 %v289
    %811 = vmatprep.subr.mxu0 %v294
    %812 = vmatpush1.msra.mxu0 %v293
    %813 = vmatprep.subr.mxu0 %v298
    %814 = vmatpush1.msra.mxu0 %v297
    %815 = vmatprep.subr.mxu0 %v302
    %816 = vmatpush1.msra.mxu0 %v301
    %817 = vmatprep.subr.mxu0 %v306
    %818 = vmatpush1.msra.mxu0 %v305
    %819 = vmatprep.subr.mxu0 %v310
    %820 = vmatpush1.msra.mxu0 %v309
    %821 = vmatprep.subr.mxu0 %v314
    %822 = vmatpush1.msra.mxu0 %v313
    %823 = vmatprep.subr.mxu0 %v318
    %824 = vmatpush1.msra.mxu0 %v317
    %825 = vmatprep.subr.mxu0 %v322
    %826 = vmatpush1.msra.mxu0 %v321
    %827 = vmatprep.subr.mxu0 %v326
    %828 = vmatpush1.msra.mxu0 %v325
    %829 = vmatprep.subr.mxu0 %v330
    %830 = vmatpush1.msra.mxu0 %v329
    %831 = vmatprep.subr.mxu0 %v334
    %832 = vmatpush1.msra.mxu0 %v333
    %833 = vmatprep.subr.mxu0 0.0
    %834 = vmatpush1.msra.mxu0 0.0
    %835 = vmatprep.subr.mxu0 0.0
    %836 = vmatpush1.msra.mxu0 0.0
    %837 = vmatprep.subr.mxu0 0.0
    %838 = vmatpush1.msra.mxu0 0.0
    %839 = vmatprep.subr.mxu0 0.0
    %840 = vmatpush1.msra.mxu0 0.0
    %841 = vmatprep.subr.mxu0 0.0
    %842 = vmatpush1.msra.mxu0 0.0
    %843 = vmatprep.subr.mxu0 0.0
    %844 = vmatpush1.msra.mxu0 0.0
    %845 = vmatprep.subr.mxu0 0.0
    %846 = vmatpush1.msra.mxu0 0.0
    %847 = vmatprep.subr.mxu0 0.0
    %848 = vmatpush1.msra.mxu0 0.0
    %849 = vmatprep.subr.mxu0 0.0
    %850 = vmatpush1.msra.mxu0 0.0
    %851 = vmatprep.subr.mxu0 0.0
    %852 = vmatpush1.msra.mxu0 0.0
    %853 = vmatprep.subr.mxu0 0.0
    %854 = vmatpush1.msra.mxu0 0.0
    %855 = vmatprep.subr.mxu0 0.0
    %856 = vmatpush1.msra.mxu0 0.0
    %857 = vmatprep.subr.mxu0 0.0
    %858 = vmatpush1.msra.mxu0 0.0
    %859 = vmatprep.subr.mxu0 0.0
    %860 = vmatpush1.msra.mxu0 0.0
    %861 = vmatprep.subr.mxu0 0.0
    %862 = vmatpush1.msra.mxu0 0.0
    %863 = vmatprep.subr.mxu0 0.0
    %864 = vmatpush1.msra.mxu0 0.0
    %865 = vmatprep.mubr.f32.mxu0 0.0
    %866 = vmatmul.mubr.f32.gmra.mrb[0].mxu0 %v726
    %v867 = vpop.f32.mrb[0].mxu0
    %v868 = vadd.f32 0.0, %v867
    %v869 = vpop.f32.mrb[0].mxu0
    %v870 = vadd.f32 0.0, %v869
    %871 = vdwg.mxu0
    %v876 = vcombine.low %v797, %v799
    %v877 = vcombine.low %v868, %v870
    %v879 = vunpack.c.l.s4 1966171168
    %v880 = vunpack.c.0.s8 %v879
    %v881 = vlaneseq
    %v882 = vshrl.u32 %v881, 7
    %v883 = vsub.s32 %v880, %v882
    %v884 = vrot.slane %v876, %v883
    %v886 = vunpack.c.l.s4 1966171168
    %v887 = vunpack.c.0.s8 %v886
    %v888 = vlaneseq
    %v889 = vshrl.u32 %v888, 7
    %v890 = vsub.s32 %v887, %v889
    %v891 = vrot.slane %v877, %v890
    %v892 = vcombine.low %v884, %v891
    %v894 = vunpack.c.l.s4 1966171168
    %v895 = vunpack.c.0.s8 %v894
    %v896 = vlaneseq
    %v897 = vshrl.u32 %v896, 7
    %v898 = vsub.s32 %v895, %v897
    %v899 = vrot.slane %v892, %v898
    %v901 = vadd.f32 %v729, %v899
    %v902 = vtanh.pop %v901
    %v903 = vmul.f32 %v902, 0.5
    %v904 = vadd.f32 %v903, 0.5
    %v906 = vrot.slane %v901, 1
    %v908 = vtanh.pop %v906
    %v909 = vmul.f32 %v908, 0.5
    %v910 = vadd.f32 %v909, 0.5
    %v911 = vrot.slane %v901, 2
    %v913 = vtanh.pop %v911
    %v914 = vrot.slane %v901, 3
    %v916 = vtanh.pop %v914
    %v917 = vmul.f32 %v916, 0.5
    %v918 = vadd.f32 %v917, 0.5
    %v919 = vmul.f32 %v910, %v724
    %v920 = vmul.f32 %v904, %v913
    %v921 = vadd.f32 %v919, %v920
    %v922 = vtanh.pop %v921
    %v923 = vmul.f32 %v918, %v922
    %924 = vst [vmem:[#allocation3 + $0x2] sm:$0x1] %v923
    %s925 = scalar_lea.vmem [#allocation2], 3
    %v926 = vld [vmem:[%s925] ss:$8 sm:$0xf]
    %927 = vmatprep.subr.mxu0 %v272
    %928 = vmatpush1.msra.mxu0 %v271
    %929 = vmatprep.subr.mxu0 %v276
    %930 = vmatpush1.msra.mxu0 %v275
    %931 = vmatprep.subr.mxu0 %v280
    %932 = vmatpush1.msra.mxu0 %v279
    %933 = vmatprep.subr.mxu0 %v284
    %934 = vmatpush1.msra.mxu0 %v283
    %935 = vmatprep.subr.mxu0 %v288
    %936 = vmatpush1.msra.mxu0 %v287
    %937 = vmatprep.subr.mxu0 %v292
    %938 = vmatpush1.msra.mxu0 %v291
    %939 = vmatprep.subr.mxu0 %v296
    %940 = vmatpush1.msra.mxu0 %v295
    %941 = vmatprep.subr.mxu0 %v300
    %942 = vmatpush1.msra.mxu0 %v299
    %943 = vmatprep.subr.mxu0 %v304
    %944 = vmatpush1.msra.mxu0 %v303
    %945 = vmatprep.subr.mxu0 %v308
    %946 = vmatpush1.msra.mxu0 %v307
    %947 = vmatprep.subr.mxu0 %v312
    %948 = vmatpush1.msra.mxu0 %v311
    %949 = vmatprep.subr.mxu0 %v316
    %950 = vmatpush1.msra.mxu0 %v315
    %951 = vmatprep.subr.mxu0 %v320
    %952 = vmatpush1.msra.mxu0 %v319
    %953 = vmatprep.subr.mxu0 %v324
    %954 = vmatpush1.msra.mxu0 %v323
    %955 = vmatprep.subr.mxu0 %v328
    %956 = vmatpush1.msra.mxu0 %v327
    %957 = vmatprep.subr.mxu0 %v332
    %958 = vmatpush1.msra.mxu0 %v331
    %959 = vmatprep.subr.mxu0 0.0
    %960 = vmatpush1.msra.mxu0 0.0
    %961 = vmatprep.subr.mxu0 0.0
    %962 = vmatpush1.msra.mxu0 0.0
    %963 = vmatprep.subr.mxu0 0.0
    %964 = vmatpush1.msra.mxu0 0.0
    %965 = vmatprep.subr.mxu0 0.0
    %966 = vmatpush1.msra.mxu0 0.0
    %967 = vmatprep.subr.mxu0 0.0
    %968 = vmatpush1.msra.mxu0 0.0
    %969 = vmatprep.subr.mxu0 0.0
    %970 = vmatpush1.msra.mxu0 0.0
    %971 = vmatprep.subr.mxu0 0.0
    %972 = vmatpush1.msra.mxu0 0.0
    %973 = vmatprep.subr.mxu0 0.0
    %974 = vmatpush1.msra.mxu0 0.0
    %975 = vmatprep.subr.mxu0 0.0
    %976 = vmatpush1.msra.mxu0 0.0
    %977 = vmatprep.subr.mxu0 0.0
    %978 = vmatpush1.msra.mxu0 0.0
    %979 = vmatprep.subr.mxu0 0.0
    %980 = vmatpush1.msra.mxu0 0.0
    %981 = vmatprep.subr.mxu0 0.0
    %982 = vmatpush1.msra.mxu0 0.0
    %983 = vmatprep.subr.mxu0 0.0
    %984 = vmatpush1.msra.mxu0 0.0
    %985 = vmatprep.subr.mxu0 0.0
    %986 = vmatpush1.msra.mxu0 0.0
    %987 = vmatprep.subr.mxu0 0.0
    %988 = vmatpush1.msra.mxu0 0.0
    %989 = vmatprep.subr.mxu0 0.0
    %990 = vmatpush1.msra.mxu0 0.0
    %991 = vmatprep.mubr.f32.mxu0 0.0
    %992 = vmatmul.mubr.f32.gmra.mrb[0].mxu0 %v923
    %v993 = vpop.f32.mrb[0].mxu0
    %v994 = vadd.f32 0.0, %v993
    %v995 = vpop.f32.mrb[0].mxu0
    %v996 = vadd.f32 0.0, %v995
    %997 = vdwg.mxu0
    %998 = vmatprep.subr.mxu0 %v274
    %999 = vmatpush1.msra.mxu0 %v273
    %1000 = vmatprep.subr.mxu0 %v278
    %1001 = vmatpush1.msra.mxu0 %v277
    %1002 = vmatprep.subr.mxu0 %v282
    %1003 = vmatpush1.msra.mxu0 %v281
    %1004 = vmatprep.subr.mxu0 %v286
    %1005 = vmatpush1.msra.mxu0 %v285
    %1006 = vmatprep.subr.mxu0 %v290
    %1007 = vmatpush1.msra.mxu0 %v289
    %1008 = vmatprep.subr.mxu0 %v294
    %1009 = vmatpush1.msra.mxu0 %v293
    %1010 = vmatprep.subr.mxu0 %v298
    %1011 = vmatpush1.msra.mxu0 %v297
    %1012 = vmatprep.subr.mxu0 %v302
    %1013 = vmatpush1.msra.mxu0 %v301
    %1014 = vmatprep.subr.mxu0 %v306
    %1015 = vmatpush1.msra.mxu0 %v305
    %1016 = vmatprep.subr.mxu0 %v310
    %1017 = vmatpush1.msra.mxu0 %v309
    %1018 = vmatprep.subr.mxu0 %v314
    %1019 = vmatpush1.msra.mxu0 %v313
    %1020 = vmatprep.subr.mxu0 %v318
    %1021 = vmatpush1.msra.mxu0 %v317
    %1022 = vmatprep.subr.mxu0 %v322
    %1023 = vmatpush1.msra.mxu0 %v321
    %1024 = vmatprep.subr.mxu0 %v326
    %1025 = vmatpush1.msra.mxu0 %v325
    %1026 = vmatprep.subr.mxu0 %v330
    %1027 = vmatpush1.msra.mxu0 %v329
    %1028 = vmatprep.subr.mxu0 %v334
    %1029 = vmatpush1.msra.mxu0 %v333
    %1030 = vmatprep.subr.mxu0 0.0
    %1031 = vmatpush1.msra.mxu0 0.0
    %1032 = vmatprep.subr.mxu0 0.0
    %1033 = vmatpush1.msra.mxu0 0.0
    %1034 = vmatprep.subr.mxu0 0.0
    %1035 = vmatpush1.msra.mxu0 0.0
    %1036 = vmatprep.subr.mxu0 0.0
    %1037 = vmatpush1.msra.mxu0 0.0
    %1038 = vmatprep.subr.mxu0 0.0
    %1039 = vmatpush1.msra.mxu0 0.0
    %1040 = vmatprep.subr.mxu0 0.0
    %1041 = vmatpush1.msra.mxu0 0.0
    %1042 = vmatprep.subr.mxu0 0.0
    %1043 = vmatpush1.msra.mxu0 0.0
    %1044 = vmatprep.subr.mxu0 0.0
    %1045 = vmatpush1.msra.mxu0 0.0
    %1046 = vmatprep.subr.mxu0 0.0
    %1047 = vmatpush1.msra.mxu0 0.0
    %1048 = vmatprep.subr.mxu0 0.0
    %1049 = vmatpush1.msra.mxu0 0.0
    %1050 = vmatprep.subr.mxu0 0.0
    %1051 = vmatpush1.msra.mxu0 0.0
    %1052 = vmatprep.subr.mxu0 0.0
    %1053 = vmatpush1.msra.mxu0 0.0
    %1054 = vmatprep.subr.mxu0 0.0
    %1055 = vmatpush1.msra.mxu0 0.0
    %1056 = vmatprep.subr.mxu0 0.0
    %1057 = vmatpush1.msra.mxu0 0.0
    %1058 = vmatprep.subr.mxu0 0.0
    %1059 = vmatpush1.msra.mxu0 0.0
    %1060 = vmatprep.subr.mxu0 0.0
    %1061 = vmatpush1.msra.mxu0 0.0
    %1062 = vmatprep.mubr.f32.mxu0 0.0
    %1063 = vmatmul.mubr.f32.gmra.mrb[0].mxu0 %v923
    %v1064 = vpop.f32.mrb[0].mxu0
    %v1065 = vadd.f32 0.0, %v1064
    %v1066 = vpop.f32.mrb[0].mxu0
    %v1067 = vadd.f32 0.0, %v1066
    %1068 = vdwg.mxu0
    %v1073 = vcombine.low %v994, %v996
    %v1074 = vcombine.low %v1065, %v1067
    %v1076 = vunpack.c.l.s4 1966171168
    %v1077 = vunpack.c.0.s8 %v1076
    %v1078 = vlaneseq
    %v1079 = vshrl.u32 %v1078, 7
    %v1080 = vsub.s32 %v1077, %v1079
    %v1081 = vrot.slane %v1073, %v1080
    %v1083 = vunpack.c.l.s4 1966171168
    %v1084 = vunpack.c.0.s8 %v1083
    %v1085 = vlaneseq
    %v1086 = vshrl.u32 %v1085, 7
    %v1087 = vsub.s32 %v1084, %v1086
    %v1088 = vrot.slane %v1074, %v1087
    %v1089 = vcombine.low %v1081, %v1088
    %v1091 = vunpack.c.l.s4 1966171168
    %v1092 = vunpack.c.0.s8 %v1091
    %v1093 = vlaneseq
    %v1094 = vshrl.u32 %v1093, 7
    %v1095 = vsub.s32 %v1092, %v1094
    %v1096 = vrot.slane %v1089, %v1095
    %v1098 = vadd.f32 %v926, %v1096
    %v1099 = vtanh.pop %v1098
    %v1100 = vmul.f32 %v1099, 0.5
    %v1101 = vadd.f32 %v1100, 0.5
    %v1103 = vrot.slane %v1098, 1
    %v1105 = vtanh.pop %v1103
    %v1106 = vmul.f32 %v1105, 0.5
    %v1107 = vadd.f32 %v1106, 0.5
    %v1108 = vrot.slane %v1098, 2
    %v1110 = vtanh.pop %v1108
    %v1111 = vrot.slane %v1098, 3
    %v1113 = vtanh.pop %v1111
    %v1114 = vmul.f32 %v1113, 0.5
    %v1115 = vadd.f32 %v1114, 0.5
    %v1116 = vmul.f32 %v1107, %v921
    %v1117 = vmul.f32 %v1101, %v1110
    %v1118 = vadd.f32 %v1116, %v1117
    %v1119 = vtanh.pop %v1118
    %v1120 = vmul.f32 %v1115, %v1119
    %1121 = vst [vmem:[#allocation3 + $0x3] sm:$0x1] %v1120
    %s1122 = scalar_lea.vmem [#allocation2], 4
    %v1123 = vld [vmem:[%s1122] ss:$8 sm:$0xf]
    %1124 = vmatprep.subr.mxu0 %v272
    %1125 = vmatpush1.msra.mxu0 %v271
    %1126 = vmatprep.subr.mxu0 %v276
    %1127 = vmatpush1.msra.mxu0 %v275
    %1128 = vmatprep.subr.mxu0 %v280
    %1129 = vmatpush1.msra.mxu0 %v279
    %1130 = vmatprep.subr.mxu0 %v284
    %1131 = vmatpush1.msra.mxu0 %v283
    %1132 = vmatprep.subr.mxu0 %v288
    %1133 = vmatpush1.msra.mxu0 %v287
    %1134 = vmatprep.subr.mxu0 %v292
    %1135 = vmatpush1.msra.mxu0 %v291
    %1136 = vmatprep.subr.mxu0 %v296
    %1137 = vmatpush1.msra.mxu0 %v295
    %1138 = vmatprep.subr.mxu0 %v300
    %1139 = vmatpush1.msra.mxu0 %v299
    %1140 = vmatprep.subr.mxu0 %v304
    %1141 = vmatpush1.msra.mxu0 %v303
    %1142 = vmatprep.subr.mxu0 %v308
    %1143 = vmatpush1.msra.mxu0 %v307
    %1144 = vmatprep.subr.mxu0 %v312
    %1145 = vmatpush1.msra.mxu0 %v311
    %1146 = vmatprep.subr.mxu0 %v316
    %1147 = vmatpush1.msra.mxu0 %v315
    %1148 = vmatprep.subr.mxu0 %v320
    %1149 = vmatpush1.msra.mxu0 %v319
    %1150 = vmatprep.subr.mxu0 %v324
    %1151 = vmatpush1.msra.mxu0 %v323
    %1152 = vmatprep.subr.mxu0 %v328
    %1153 = vmatpush1.msra.mxu0 %v327
    %1154 = vmatprep.subr.mxu0 %v332
    %1155 = vmatpush1.msra.mxu0 %v331
    %1156 = vmatprep.subr.mxu0 0.0
    %1157 = vmatpush1.msra.mxu0 0.0
    %1158 = vmatprep.subr.mxu0 0.0
    %1159 = vmatpush1.msra.mxu0 0.0
    %1160 = vmatprep.subr.mxu0 0.0
    %1161 = vmatpush1.msra.mxu0 0.0
    %1162 = vmatprep.subr.mxu0 0.0
    %1163 = vmatpush1.msra.mxu0 0.0
    %1164 = vmatprep.subr.mxu0 0.0
    %1165 = vmatpush1.msra.mxu0 0.0
    %1166 = vmatprep.subr.mxu0 0.0
    %1167 = vmatpush1.msra.mxu0 0.0
    %1168 = vmatprep.subr.mxu0 0.0
    %1169 = vmatpush1.msra.mxu0 0.0
    %1170 = vmatprep.subr.mxu0 0.0
    %1171 = vmatpush1.msra.mxu0 0.0
    %1172 = vmatprep.subr.mxu0 0.0
    %1173 = vmatpush1.msra.mxu0 0.0
    %1174 = vmatprep.subr.mxu0 0.0
    %1175 = vmatpush1.msra.mxu0 0.0
    %1176 = vmatprep.subr.mxu0 0.0
    %1177 = vmatpush1.msra.mxu0 0.0
    %1178 = vmatprep.subr.mxu0 0.0
    %1179 = vmatpush1.msra.mxu0 0.0
    %1180 = vmatprep.subr.mxu0 0.0
    %1181 = vmatpush1.msra.mxu0 0.0
    %1182 = vmatprep.subr.mxu0 0.0
    %1183 = vmatpush1.msra.mxu0 0.0
    %1184 = vmatprep.subr.mxu0 0.0
    %1185 = vmatpush1.msra.mxu0 0.0
    %1186 = vmatprep.subr.mxu0 0.0
    %1187 = vmatpush1.msra.mxu0 0.0
    %1188 = vmatprep.mubr.f32.mxu0 0.0
    %1189 = vmatmul.mubr.f32.gmra.mrb[0].mxu0 %v1120
    %v1190 = vpop.f32.mrb[0].mxu0
    %v1191 = vadd.f32 0.0, %v1190
    %v1192 = vpop.f32.mrb[0].mxu0
    %v1193 = vadd.f32 0.0, %v1192
    %1194 = vdwg.mxu0
    %1195 = vmatprep.subr.mxu0 %v274
    %1196 = vmatpush1.msra.mxu0 %v273
    %1197 = vmatprep.subr.mxu0 %v278
    %1198 = vmatpush1.msra.mxu0 %v277
    %1199 = vmatprep.subr.mxu0 %v282
    %1200 = vmatpush1.msra.mxu0 %v281
    %1201 = vmatprep.subr.mxu0 %v286
    %1202 = vmatpush1.msra.mxu0 %v285
    %1203 = vmatprep.subr.mxu0 %v290
    %1204 = vmatpush1.msra.mxu0 %v289
    %1205 = vmatprep.subr.mxu0 %v294
    %1206 = vmatpush1.msra.mxu0 %v293
    %1207 = vmatprep.subr.mxu0 %v298
    %1208 = vmatpush1.msra.mxu0 %v297
    %1209 = vmatprep.subr.mxu0 %v302
    %1210 = vmatpush1.msra.mxu0 %v301
    %1211 = vmatprep.subr.mxu0 %v306
    %1212 = vmatpush1.msra.mxu0 %v305
    %1213 = vmatprep.subr.mxu0 %v310
    %1214 = vmatpush1.msra.mxu0 %v309
    %1215 = vmatprep.subr.mxu0 %v314
    %1216 = vmatpush1.msra.mxu0 %v313
    %1217 = vmatprep.subr.mxu0 %v318
    %1218 = vmatpush1.msra.mxu0 %v317
    %1219 = vmatprep.subr.mxu0 %v322
    %1220 = vmatpush1.msra.mxu0 %v321
    %1221 = vmatprep.subr.mxu0 %v326
    %1222 = vmatpush1.msra.mxu0 %v325
    %1223 = vmatprep.subr.mxu0 %v330
    %1224 = vmatpush1.msra.mxu0 %v329
    %1225 = vmatprep.subr.mxu0 %v334
    %1226 = vmatpush1.msra.mxu0 %v333
    %1227 = vmatprep.subr.mxu0 0.0
    %1228 = vmatpush1.msra.mxu0 0.0
    %1229 = vmatprep.subr.mxu0 0.0
    %1230 = vmatpush1.msra.mxu0 0.0
    %1231 = vmatprep.subr.mxu0 0.0
    %1232 = vmatpush1.msra.mxu0 0.0
    %1233 = vmatprep.subr.mxu0 0.0
    %1234 = vmatpush1.msra.mxu0 0.0
    %1235 = vmatprep.subr.mxu0 0.0
    %1236 = vmatpush1.msra.mxu0 0.0
    %1237 = vmatprep.subr.mxu0 0.0
    %1238 = vmatpush1.msra.mxu0 0.0
    %1239 = vmatprep.subr.mxu0 0.0
    %1240 = vmatpush1.msra.mxu0 0.0
    %1241 = vmatprep.subr.mxu0 0.0
    %1242 = vmatpush1.msra.mxu0 0.0
    %1243 = vmatprep.subr.mxu0 0.0
    %1244 = vmatpush1.msra.mxu0 0.0
    %1245 = vmatprep.subr.mxu0 0.0
    %1246 = vmatpush1.msra.mxu0 0.0
    %1247 = vmatprep.subr.mxu0 0.0
    %1248 = vmatpush1.msra.mxu0 0.0
    %1249 = vmatprep.subr.mxu0 0.0
    %1250 = vmatpush1.msra.mxu0 0.0
    %1251 = vmatprep.subr.mxu0 0.0
    %1252 = vmatpush1.msra.mxu0 0.0
    %1253 = vmatprep.subr.mxu0 0.0
    %1254 = vmatpush1.msra.mxu0 0.0
    %1255 = vmatprep.subr.mxu0 0.0
    %1256 = vmatpush1.msra.mxu0 0.0
    %1257 = vmatprep.subr.mxu0 0.0
    %1258 = vmatpush1.msra.mxu0 0.0
    %1259 = vmatprep.mubr.f32.mxu0 0.0
    %1260 = vmatmul.mubr.f32.gmra.mrb[0].mxu0 %v1120
    %v1261 = vpop.f32.mrb[0].mxu0
    %v1262 = vadd.f32 0.0, %v1261
    %v1263 = vpop.f32.mrb[0].mxu0
    %v1264 = vadd.f32 0.0, %v1263
    %1265 = vdwg.mxu0
    %v1270 = vcombine.low %v1191, %v1193
    %v1271 = vcombine.low %v1262, %v1264
    %v1273 = vunpack.c.l.s4 1966171168
    %v1274 = vunpack.c.0.s8 %v1273
    %v1275 = vlaneseq
    %v1276 = vshrl.u32 %v1275, 7
    %v1277 = vsub.s32 %v1274, %v1276
    %v1278 = vrot.slane %v1270, %v1277
    %v1280 = vunpack.c.l.s4 1966171168
    %v1281 = vunpack.c.0.s8 %v1280
    %v1282 = vlaneseq
    %v1283 = vshrl.u32 %v1282, 7
    %v1284 = vsub.s32 %v1281, %v1283
    %v1285 = vrot.slane %v1271, %v1284
    %v1286 = vcombine.low %v1278, %v1285
    %v1288 = vunpack.c.l.s4 1966171168
    %v1289 = vunpack.c.0.s8 %v1288
    %v1290 = vlaneseq
    %v1291 = vshrl.u32 %v1290, 7
    %v1292 = vsub.s32 %v1289, %v1291
    %v1293 = vrot.slane %v1286, %v1292
    %v1295 = vadd.f32 %v1123, %v1293
    %v1296 = vtanh.pop %v1295
    %v1297 = vmul.f32 %v1296, 0.5
    %v1298 = vadd.f32 %v1297, 0.5
    %v1300 = vrot.slane %v1295, 1
    %v1302 = vtanh.pop %v1300
    %v1303 = vmul.f32 %v1302, 0.5
    %v1304 = vadd.f32 %v1303, 0.5
    %v1305 = vrot.slane %v1295, 2
    %v1307 = vtanh.pop %v1305
    %v1308 = vrot.slane %v1295, 3
    %v1310 = vtanh.pop %v1308
    %v1311 = vmul.f32 %v1310, 0.5
    %v1312 = vadd.f32 %v1311, 0.5
    %v1313 = vmul.f32 %v1304, %v1118
    %v1314 = vmul.f32 %v1298, %v1307
    %v1315 = vadd.f32 %v1313, %v1314
    %v1316 = vtanh.pop %v1315
    %v1317 = vmul.f32 %v1312, %v1316
    %1318 = vst [vmem:[#allocation3 + $0x4] sm:$0x1] %v1317
    %s1319 = scalar_lea.vmem [#allocation2], 5
    %v1320 = vld [vmem:[%s1319] ss:$8 sm:$0xf]
    %1321 = vmatprep.subr.mxu0 %v272
    %1322 = vmatpush1.msra.mxu0 %v271
    %1323 = vmatprep.subr.mxu0 %v276
    %1324 = vmatpush1.msra.mxu0 %v275
    %1325 = vmatprep.subr.mxu0 %v280
    %1326 = vmatpush1.msra.mxu0 %v279
    %1327 = vmatprep.subr.mxu0 %v284
    %1328 = vmatpush1.msra.mxu0 %v283
    %1329 = vmatprep.subr.mxu0 %v288
    %1330 = vmatpush1.msra.mxu0 %v287
    %1331 = vmatprep.subr.mxu0 %v292
    %1332 = vmatpush1.msra.mxu0 %v291
    %1333 = vmatprep.subr.mxu0 %v296
    %1334 = vmatpush1.msra.mxu0 %v295
    %1335 = vmatprep.subr.mxu0 %v300
    %1336 = vmatpush1.msra.mxu0 %v299
    %1337 = vmatprep.subr.mxu0 %v304
    %1338 = vmatpush1.msra.mxu0 %v303
    %1339 = vmatprep.subr.mxu0 %v308
    %1340 = vmatpush1.msra.mxu0 %v307
    %1341 = vmatprep.subr.mxu0 %v312
    %1342 = vmatpush1.msra.mxu0 %v311
    %1343 = vmatprep.subr.mxu0 %v316
    %1344 = vmatpush1.msra.mxu0 %v315
    %1345 = vmatprep.subr.mxu0 %v320
    %1346 = vmatpush1.msra.mxu0 %v319
    %1347 = vmatprep.subr.mxu0 %v324
    %1348 = vmatpush1.msra.mxu0 %v323
    %1349 = vmatprep.subr.mxu0 %v328
    %1350 = vmatpush1.msra.mxu0 %v327
    %1351 = vmatprep.subr.mxu0 %v332
    %1352 = vmatpush1.msra.mxu0 %v331
    %1353 = vmatprep.subr.mxu0 0.0
    %1354 = vmatpush1.msra.mxu0 0.0
    %1355 = vmatprep.subr.mxu0 0.0
    %1356 = vmatpush1.msra.mxu0 0.0
    %1357 = vmatprep.subr.mxu0 0.0
    %1358 = vmatpush1.msra.mxu0 0.0
    %1359 = vmatprep.subr.mxu0 0.0
    %1360 = vmatpush1.msra.mxu0 0.0
    %1361 = vmatprep.subr.mxu0 0.0
    %1362 = vmatpush1.msra.mxu0 0.0
    %1363 = vmatprep.subr.mxu0 0.0
    %1364 = vmatpush1.msra.mxu0 0.0
    %1365 = vmatprep.subr.mxu0 0.0
    %1366 = vmatpush1.msra.mxu0 0.0
    %1367 = vmatprep.subr.mxu0 0.0
    %1368 = vmatpush1.msra.mxu0 0.0
    %1369 = vmatprep.subr.mxu0 0.0
    %1370 = vmatpush1.msra.mxu0 0.0
    %1371 = vmatprep.subr.mxu0 0.0
    %1372 = vmatpush1.msra.mxu0 0.0
    %1373 = vmatprep.subr.mxu0 0.0
    %1374 = vmatpush1.msra.mxu0 0.0
    %1375 = vmatprep.subr.mxu0 0.0
    %1376 = vmatpush1.msra.mxu0 0.0
    %1377 = vmatprep.subr.mxu0 0.0
    %1378 = vmatpush1.msra.mxu0 0.0
    %1379 = vmatprep.subr.mxu0 0.0
    %1380 = vmatpush1.msra.mxu0 0.0
    %1381 = vmatprep.subr.mxu0 0.0
    %1382 = vmatpush1.msra.mxu0 0.0
    %1383 = vmatprep.subr.mxu0 0.0
    %1384 = vmatpush1.msra.mxu0 0.0
    %1385 = vmatprep.mubr.f32.mxu0 0.0
    %1386 = vmatmul.mubr.f32.gmra.mrb[0].mxu0 %v1317
    %v1387 = vpop.f32.mrb[0].mxu0
    %v1388 = vadd.f32 0.0, %v1387
    %v1389 = vpop.f32.mrb[0].mxu0
    %v1390 = vadd.f32 0.0, %v1389
    %1391 = vdwg.mxu0
    %1392 = vmatprep.subr.mxu0 %v274
    %1393 = vmatpush1.msra.mxu0 %v273
    %1394 = vmatprep.subr.mxu0 %v278
    %1395 = vmatpush1.msra.mxu0 %v277
    %1396 = vmatprep.subr.mxu0 %v282
    %1397 = vmatpush1.msra.mxu0 %v281
    %1398 = vmatprep.subr.mxu0 %v286
    %1399 = vmatpush1.msra.mxu0 %v285
    %1400 = vmatprep.subr.mxu0 %v290
    %1401 = vmatpush1.msra.mxu0 %v289
    %1402 = vmatprep.subr.mxu0 %v294
    %1403 = vmatpush1.msra.mxu0 %v293
    %1404 = vmatprep.subr.mxu0 %v298
    %1405 = vmatpush1.msra.mxu0 %v297
    %1406 = vmatprep.subr.mxu0 %v302
    %1407 = vmatpush1.msra.mxu0 %v301
    %1408 = vmatprep.subr.mxu0 %v306
    %1409 = vmatpush1.msra.mxu0 %v305
    %1410 = vmatprep.subr.mxu0 %v310
    %1411 = vmatpush1.msra.mxu0 %v309
    %1412 = vmatprep.subr.mxu0 %v314
    %1413 = vmatpush1.msra.mxu0 %v313
    %1414 = vmatprep.subr.mxu0 %v318
    %1415 = vmatpush1.msra.mxu0 %v317
    %1416 = vmatprep.subr.mxu0 %v322
    %1417 = vmatpush1.msra.mxu0 %v321
    %1418 = vmatprep.subr.mxu0 %v326
    %1419 = vmatpush1.msra.mxu0 %v325
    %1420 = vmatprep.subr.mxu0 %v330
    %1421 = vmatpush1.msra.mxu0 %v329
    %1422 = vmatprep.subr.mxu0 %v334
    %1423 = vmatpush1.msra.mxu0 %v333
    %1424 = vmatprep.subr.mxu0 0.0
    %1425 = vmatpush1.msra.mxu0 0.0
    %1426 = vmatprep.subr.mxu0 0.0
    %1427 = vmatpush1.msra.mxu0 0.0
    %1428 = vmatprep.subr.mxu0 0.0
    %1429 = vmatpush1.msra.mxu0 0.0
    %1430 = vmatprep.subr.mxu0 0.0
    %1431 = vmatpush1.msra.mxu0 0.0
    %1432 = vmatprep.subr.mxu0 0.0
    %1433 = vmatpush1.msra.mxu0 0.0
    %1434 = vmatprep.subr.mxu0 0.0
    %1435 = vmatpush1.msra.mxu0 0.0
    %1436 = vmatprep.subr.mxu0 0.0
    %1437 = vmatpush1.msra.mxu0 0.0
    %1438 = vmatprep.subr.mxu0 0.0
    %1439 = vmatpush1.msra.mxu0 0.0
    %1440 = vmatprep.subr.mxu0 0.0
    %1441 = vmatpush1.msra.mxu0 0.0
    %1442 = vmatprep.subr.mxu0 0.0
    %1443 = vmatpush1.msra.mxu0 0.0
    %1444 = vmatprep.subr.mxu0 0.0
    %1445 = vmatpush1.msra.mxu0 0.0
    %1446 = vmatprep.subr.mxu0 0.0
    %1447 = vmatpush1.msra.mxu0 0.0
    %1448 = vmatprep.subr.mxu0 0.0
    %1449 = vmatpush1.msra.mxu0 0.0
    %1450 = vmatprep.subr.mxu0 0.0
    %1451 = vmatpush1.msra.mxu0 0.0
    %1452 = vmatprep.subr.mxu0 0.0
    %1453 = vmatpush1.msra.mxu0 0.0
    %1454 = vmatprep.subr.mxu0 0.0
    %1455 = vmatpush1.msra.mxu0 0.0
    %1456 = vmatprep.mubr.f32.mxu0 0.0
    %1457 = vmatmul.mubr.f32.gmra.mrb[0].mxu0 %v1317
    %v1458 = vpop.f32.mrb[0].mxu0
    %v1459 = vadd.f32 0.0, %v1458
    %v1460 = vpop.f32.mrb[0].mxu0
    %v1461 = vadd.f32 0.0, %v1460
    %1462 = vdwg.mxu0
    %v1467 = vcombine.low %v1388, %v1390
    %v1468 = vcombine.low %v1459, %v1461
    %v1470 = vunpack.c.l.s4 1966171168
    %v1471 = vunpack.c.0.s8 %v1470
    %v1472 = vlaneseq
    %v1473 = vshrl.u32 %v1472, 7
    %v1474 = vsub.s32 %v1471, %v1473
    %v1475 = vrot.slane %v1467, %v1474
    %v1477 = vunpack.c.l.s4 1966171168
    %v1478 = vunpack.c.0.s8 %v1477
    %v1479 = vlaneseq
    %v1480 = vshrl.u32 %v1479, 7
    %v1481 = vsub.s32 %v1478, %v1480
    %v1482 = vrot.slane %v1468, %v1481
    %v1483 = vcombine.low %v1475, %v1482
    %v1485 = vunpack.c.l.s4 1966171168
    %v1486 = vunpack.c.0.s8 %v1485
    %v1487 = vlaneseq
    %v1488 = vshrl.u32 %v1487, 7
    %v1489 = vsub.s32 %v1486, %v1488
    %v1490 = vrot.slane %v1483, %v1489
    %v1492 = vadd.f32 %v1320, %v1490
    %v1493 = vtanh.pop %v1492
    %v1494 = vmul.f32 %v1493, 0.5
    %v1495 = vadd.f32 %v1494, 0.5
    %v1497 = vrot.slane %v1492, 1
    %v1499 = vtanh.pop %v1497
    %v1500 = vmul.f32 %v1499, 0.5
    %v1501 = vadd.f32 %v1500, 0.5
    %v1502 = vrot.slane %v1492, 2
    %v1504 = vtanh.pop %v1502
    %v1505 = vrot.slane %v1492, 3
    %v1507 = vtanh.pop %v1505
    %v1508 = vmul.f32 %v1507, 0.5
    %v1509 = vadd.f32 %v1508, 0.5
    %v1510 = vmul.f32 %v1501, %v1315
    %v1511 = vmul.f32 %v1495, %v1504
    %v1512 = vadd.f32 %v1510, %v1511
    %v1513 = vtanh.pop %v1512
    %v1514 = vmul.f32 %v1509, %v1513
    %1515 = vst [vmem:[#allocation3 + $0x5] sm:$0x1] %v1514
    %s1516 = scalar_lea.vmem [#allocation2], 6
    %v1517 = vld [vmem:[%s1516] ss:$8 sm:$0xf]
    %1518 = vmatprep.subr.mxu0 %v272
    %1519 = vmatpush1.msra.mxu0 %v271
    %1520 = vmatprep.subr.mxu0 %v276
    %1521 = vmatpush1.msra.mxu0 %v275
    %1522 = vmatprep.subr.mxu0 %v280
    %1523 = vmatpush1.msra.mxu0 %v279
    %1524 = vmatprep.subr.mxu0 %v284
    %1525 = vmatpush1.msra.mxu0 %v283
    %1526 = vmatprep.subr.mxu0 %v288
    %1527 = vmatpush1.msra.mxu0 %v287
    %1528 = vmatprep.subr.mxu0 %v292
    %1529 = vmatpush1.msra.mxu0 %v291
    %1530 = vmatprep.subr.mxu0 %v296
    %1531 = vmatpush1.msra.mxu0 %v295
    %1532 = vmatprep.subr.mxu0 %v300
    %1533 = vmatpush1.msra.mxu0 %v299
    %1534 = vmatprep.subr.mxu0 %v304
    %1535 = vmatpush1.msra.mxu0 %v303
    %1536 = vmatprep.subr.mxu0 %v308
    %1537 = vmatpush1.msra.mxu0 %v307
    %1538 = vmatprep.subr.mxu0 %v312
    %1539 = vmatpush1.msra.mxu0 %v311
    %1540 = vmatprep.subr.mxu0 %v316
    %1541 = vmatpush1.msra.mxu0 %v315
    %1542 = vmatprep.subr.mxu0 %v320
    %1543 = vmatpush1.msra.mxu0 %v319
    %1544 = vmatprep.subr.mxu0 %v324
    %1545 = vmatpush1.msra.mxu0 %v323
    %1546 = vmatprep.subr.mxu0 %v328
    %1547 = vmatpush1.msra.mxu0 %v327
    %1548 = vmatprep.subr.mxu0 %v332
    %1549 = vmatpush1.msra.mxu0 %v331
    %1550 = vmatprep.subr.mxu0 0.0
    %1551 = vmatpush1.msra.mxu0 0.0
    %1552 = vmatprep.subr.mxu0 0.0
    %1553 = vmatpush1.msra.mxu0 0.0
    %1554 = vmatprep.subr.mxu0 0.0
    %1555 = vmatpush1.msra.mxu0 0.0
    %1556 = vmatprep.subr.mxu0 0.0
    %1557 = vmatpush1.msra.mxu0 0.0
    %1558 = vmatprep.subr.mxu0 0.0
    %1559 = vmatpush1.msra.mxu0 0.0
    %1560 = vmatprep.subr.mxu0 0.0
    %1561 = vmatpush1.msra.mxu0 0.0
    %1562 = vmatprep.subr.mxu0 0.0
    %1563 = vmatpush1.msra.mxu0 0.0
    %1564 = vmatprep.subr.mxu0 0.0
    %1565 = vmatpush1.msra.mxu0 0.0
    %1566 = vmatprep.subr.mxu0 0.0
    %1567 = vmatpush1.msra.mxu0 0.0
    %1568 = vmatprep.subr.mxu0 0.0
    %1569 = vmatpush1.msra.mxu0 0.0
    %1570 = vmatprep.subr.mxu0 0.0
    %1571 = vmatpush1.msra.mxu0 0.0
    %1572 = vmatprep.subr.mxu0 0.0
    %1573 = vmatpush1.msra.mxu0 0.0
    %1574 = vmatprep.subr.mxu0 0.0
    %1575 = vmatpush1.msra.mxu0 0.0
    %1576 = vmatprep.subr.mxu0 0.0
    %1577 = vmatpush1.msra.mxu0 0.0
    %1578 = vmatprep.subr.mxu0 0.0
    %1579 = vmatpush1.msra.mxu0 0.0
    %1580 = vmatprep.subr.mxu0 0.0
    %1581 = vmatpush1.msra.mxu0 0.0
    %1582 = vmatprep.mubr.f32.mxu0 0.0
    %1583 = vmatmul.mubr.f32.gmra.mrb[0].mxu0 %v1514
    %v1584 = vpop.f32.mrb[0].mxu0
    %v1585 = vadd.f32 0.0, %v1584
    %v1586 = vpop.f32.mrb[0].mxu0
    %v1587 = vadd.f32 0.0, %v1586
    %1588 = vdwg.mxu0
    %1589 = vmatprep.subr.mxu0 %v274
    %1590 = vmatpush1.msra.mxu0 %v273
    %1591 = vmatprep.subr.mxu0 %v278
    %1592 = vmatpush1.msra.mxu0 %v277
    %1593 = vmatprep.subr.mxu0 %v282
    %1594 = vmatpush1.msra.mxu0 %v281
    %1595 = vmatprep.subr.mxu0 %v286
    %1596 = vmatpush1.msra.mxu0 %v285
    %1597 = vmatprep.subr.mxu0 %v290
    %1598 = vmatpush1.msra.mxu0 %v289
    %1599 = vmatprep.subr.mxu0 %v294
    %1600 = vmatpush1.msra.mxu0 %v293
    %1601 = vmatprep.subr.mxu0 %v298
    %1602 = vmatpush1.msra.mxu0 %v297
    %1603 = vmatprep.subr.mxu0 %v302
    %1604 = vmatpush1.msra.mxu0 %v301
    %1605 = vmatprep.subr.mxu0 %v306
    %1606 = vmatpush1.msra.mxu0 %v305
    %1607 = vmatprep.subr.mxu0 %v310
    %1608 = vmatpush1.msra.mxu0 %v309
    %1609 = vmatprep.subr.mxu0 %v314
    %1610 = vmatpush1.msra.mxu0 %v313
    %1611 = vmatprep.subr.mxu0 %v318
    %1612 = vmatpush1.msra.mxu0 %v317
    %1613 = vmatprep.subr.mxu0 %v322
    %1614 = vmatpush1.msra.mxu0 %v321
    %1615 = vmatprep.subr.mxu0 %v326
    %1616 = vmatpush1.msra.mxu0 %v325
    %1617 = vmatprep.subr.mxu0 %v330
    %1618 = vmatpush1.msra.mxu0 %v329
    %1619 = vmatprep.subr.mxu0 %v334
    %1620 = vmatpush1.msra.mxu0 %v333
    %1621 = vmatprep.subr.mxu0 0.0
    %1622 = vmatpush1.msra.mxu0 0.0
    %1623 = vmatprep.subr.mxu0 0.0
    %1624 = vmatpush1.msra.mxu0 0.0
    %1625 = vmatprep.subr.mxu0 0.0
    %1626 = vmatpush1.msra.mxu0 0.0
    %1627 = vmatprep.subr.mxu0 0.0
    %1628 = vmatpush1.msra.mxu0 0.0
    %1629 = vmatprep.subr.mxu0 0.0
    %1630 = vmatpush1.msra.mxu0 0.0
    %1631 = vmatprep.subr.mxu0 0.0
    %1632 = vmatpush1.msra.mxu0 0.0
    %1633 = vmatprep.subr.mxu0 0.0
    %1634 = vmatpush1.msra.mxu0 0.0
    %1635 = vmatprep.subr.mxu0 0.0
    %1636 = vmatpush1.msra.mxu0 0.0
    %1637 = vmatprep.subr.mxu0 0.0
    %1638 = vmatpush1.msra.mxu0 0.0
    %1639 = vmatprep.subr.mxu0 0.0
    %1640 = vmatpush1.msra.mxu0 0.0
    %1641 = vmatprep.subr.mxu0 0.0
    %1642 = vmatpush1.msra.mxu0 0.0
    %1643 = vmatprep.subr.mxu0 0.0
    %1644 = vmatpush1.msra.mxu0 0.0
    %1645 = vmatprep.subr.mxu0 0.0
    %1646 = vmatpush1.msra.mxu0 0.0
    %1647 = vmatprep.subr.mxu0 0.0
    %1648 = vmatpush1.msra.mxu0 0.0
    %1649 = vmatprep.subr.mxu0 0.0
    %1650 = vmatpush1.msra.mxu0 0.0
    %1651 = vmatprep.subr.mxu0 0.0
    %1652 = vmatpush1.msra.mxu0 0.0
    %1653 = vmatprep.mubr.f32.mxu0 0.0
    %1654 = vmatmul.mubr.f32.gmra.mrb[0].mxu0 %v1514
    %v1655 = vpop.f32.mrb[0].mxu0
    %v1656 = vadd.f32 0.0, %v1655
    %v1657 = vpop.f32.mrb[0].mxu0
    %v1658 = vadd.f32 0.0, %v1657
    %1659 = vdwg.mxu0
    %v1664 = vcombine.low %v1585, %v1587
    %v1665 = vcombine.low %v1656, %v1658
    %v1667 = vunpack.c.l.s4 1966171168
    %v1668 = vunpack.c.0.s8 %v1667
    %v1669 = vlaneseq
    %v1670 = vshrl.u32 %v1669, 7
    %v1671 = vsub.s32 %v1668, %v1670
    %v1672 = vrot.slane %v1664, %v1671
    %v1674 = vunpack.c.l.s4 1966171168
    %v1675 = vunpack.c.0.s8 %v1674
    %v1676 = vlaneseq
    %v1677 = vshrl.u32 %v1676, 7
    %v1678 = vsub.s32 %v1675, %v1677
    %v1679 = vrot.slane %v1665, %v1678
    %v1680 = vcombine.low %v1672, %v1679
    %v1682 = vunpack.c.l.s4 1966171168
    %v1683 = vunpack.c.0.s8 %v1682
    %v1684 = vlaneseq
    %v1685 = vshrl.u32 %v1684, 7
    %v1686 = vsub.s32 %v1683, %v1685
    %v1687 = vrot.slane %v1680, %v1686
    %v1689 = vadd.f32 %v1517, %v1687
    %v1690 = vtanh.pop %v1689
    %v1691 = vmul.f32 %v1690, 0.5
    %v1692 = vadd.f32 %v1691, 0.5
    %v1694 = vrot.slane %v1689, 1
    %v1696 = vtanh.pop %v1694
    %v1697 = vmul.f32 %v1696, 0.5
    %v1698 = vadd.f32 %v1697, 0.5
    %v1699 = vrot.slane %v1689, 2
    %v1701 = vtanh.pop %v1699
    %v1702 = vrot.slane %v1689, 3
    %v1704 = vtanh.pop %v1702
    %v1705 = vmul.f32 %v1704, 0.5
    %v1706 = vadd.f32 %v1705, 0.5
    %v1707 = vmul.f32 %v1698, %v1512
    %v1708 = vmul.f32 %v1692, %v1701
    %v1709 = vadd.f32 %v1707, %v1708
    %v1710 = vtanh.pop %v1709
    %v1711 = vmul.f32 %v1706, %v1710
    %1712 = vst [vmem:[#allocation3 + $0x6] sm:$0x1] %v1711
    %s1713 = scalar_lea.vmem [#allocation2], 7
    %v1714 = vld [vmem:[%s1713] ss:$8 sm:$0xf]
    %1715 = vmatprep.subr.mxu0 %v272
    %1716 = vmatpush1.msra.mxu0 %v271
    %1717 = vmatprep.subr.mxu0 %v276
    %1718 = vmatpush1.msra.mxu0 %v275
    %1719 = vmatprep.subr.mxu0 %v280
    %1720 = vmatpush1.msra.mxu0 %v279
    %1721 = vmatprep.subr.mxu0 %v284
    %1722 = vmatpush1.msra.mxu0 %v283
    %1723 = vmatprep.subr.mxu0 %v288
    %1724 = vmatpush1.msra.mxu0 %v287
    %1725 = vmatprep.subr.mxu0 %v292
    %1726 = vmatpush1.msra.mxu0 %v291
    %1727 = vmatprep.subr.mxu0 %v296
    %1728 = vmatpush1.msra.mxu0 %v295
    %1729 = vmatprep.subr.mxu0 %v300
    %1730 = vmatpush1.msra.mxu0 %v299
    %1731 = vmatprep.subr.mxu0 %v304
    %1732 = vmatpush1.msra.mxu0 %v303
    %1733 = vmatprep.subr.mxu0 %v308
    %1734 = vmatpush1.msra.mxu0 %v307
    %1735 = vmatprep.subr.mxu0 %v312
    %1736 = vmatpush1.msra.mxu0 %v311
    %1737 = vmatprep.subr.mxu0 %v316
    %1738 = vmatpush1.msra.mxu0 %v315
    %1739 = vmatprep.subr.mxu0 %v320
    %1740 = vmatpush1.msra.mxu0 %v319
    %1741 = vmatprep.subr.mxu0 %v324
    %1742 = vmatpush1.msra.mxu0 %v323
    %1743 = vmatprep.subr.mxu0 %v328
    %1744 = vmatpush1.msra.mxu0 %v327
    %1745 = vmatprep.subr.mxu0 %v332
    %1746 = vmatpush1.msra.mxu0 %v331
    %1747 = vmatprep.subr.mxu0 0.0
    %1748 = vmatpush1.msra.mxu0 0.0
    %1749 = vmatprep.subr.mxu0 0.0
    %1750 = vmatpush1.msra.mxu0 0.0
    %1751 = vmatprep.subr.mxu0 0.0
    %1752 = vmatpush1.msra.mxu0 0.0
    %1753 = vmatprep.subr.mxu0 0.0
    %1754 = vmatpush1.msra.mxu0 0.0
    %1755 = vmatprep.subr.mxu0 0.0
    %1756 = vmatpush1.msra.mxu0 0.0
    %1757 = vmatprep.subr.mxu0 0.0
    %1758 = vmatpush1.msra.mxu0 0.0
    %1759 = vmatprep.subr.mxu0 0.0
    %1760 = vmatpush1.msra.mxu0 0.0
    %1761 = vmatprep.subr.mxu0 0.0
    %1762 = vmatpush1.msra.mxu0 0.0
    %1763 = vmatprep.subr.mxu0 0.0
    %1764 = vmatpush1.msra.mxu0 0.0
    %1765 = vmatprep.subr.mxu0 0.0
    %1766 = vmatpush1.msra.mxu0 0.0
    %1767 = vmatprep.subr.mxu0 0.0
    %1768 = vmatpush1.msra.mxu0 0.0
    %1769 = vmatprep.subr.mxu0 0.0
    %1770 = vmatpush1.msra.mxu0 0.0
    %1771 = vmatprep.subr.mxu0 0.0
    %1772 = vmatpush1.msra.mxu0 0.0
    %1773 = vmatprep.subr.mxu0 0.0
    %1774 = vmatpush1.msra.mxu0 0.0
    %1775 = vmatprep.subr.mxu0 0.0
    %1776 = vmatpush1.msra.mxu0 0.0
    %1777 = vmatprep.subr.mxu0 0.0
    %1778 = vmatpush1.msra.mxu0 0.0
    %1779 = vmatprep.mubr.f32.mxu0 0.0
    %1780 = vmatmul.mubr.f32.gmra.mrb[0].mxu0 %v1711
    %v1781 = vpop.f32.mrb[0].mxu0
    %v1782 = vadd.f32 0.0, %v1781
    %v1783 = vpop.f32.mrb[0].mxu0
    %v1784 = vadd.f32 0.0, %v1783
    %1785 = vdwg.mxu0
    %1786 = vmatprep.subr.mxu0 %v274
    %1787 = vmatpush1.msra.mxu0 %v273
    %1788 = vmatprep.subr.mxu0 %v278
    %1789 = vmatpush1.msra.mxu0 %v277
    %1790 = vmatprep.subr.mxu0 %v282
    %1791 = vmatpush1.msra.mxu0 %v281
    %1792 = vmatprep.subr.mxu0 %v286
    %1793 = vmatpush1.msra.mxu0 %v285
    %1794 = vmatprep.subr.mxu0 %v290
    %1795 = vmatpush1.msra.mxu0 %v289
    %1796 = vmatprep.subr.mxu0 %v294
    %1797 = vmatpush1.msra.mxu0 %v293
    %1798 = vmatprep.subr.mxu0 %v298
    %1799 = vmatpush1.msra.mxu0 %v297
    %1800 = vmatprep.subr.mxu0 %v302
    %1801 = vmatpush1.msra.mxu0 %v301
    %1802 = vmatprep.subr.mxu0 %v306
    %1803 = vmatpush1.msra.mxu0 %v305
    %1804 = vmatprep.subr.mxu0 %v310
    %1805 = vmatpush1.msra.mxu0 %v309
    %1806 = vmatprep.subr.mxu0 %v314
    %1807 = vmatpush1.msra.mxu0 %v313
    %1808 = vmatprep.subr.mxu0 %v318
    %1809 = vmatpush1.msra.mxu0 %v317
    %1810 = vmatprep.subr.mxu0 %v322
    %1811 = vmatpush1.msra.mxu0 %v321
    %1812 = vmatprep.subr.mxu0 %v326
    %1813 = vmatpush1.msra.mxu0 %v325
    %1814 = vmatprep.subr.mxu0 %v330
    %1815 = vmatpush1.msra.mxu0 %v329
    %1816 = vmatprep.subr.mxu0 %v334
    %1817 = vmatpush1.msra.mxu0 %v333
    %1818 = vmatprep.subr.mxu0 0.0
    %1819 = vmatpush1.msra.mxu0 0.0
    %1820 = vmatprep.subr.mxu0 0.0
    %1821 = vmatpush1.msra.mxu0 0.0
    %1822 = vmatprep.subr.mxu0 0.0
    %1823 = vmatpush1.msra.mxu0 0.0
    %1824 = vmatprep.subr.mxu0 0.0
    %1825 = vmatpush1.msra.mxu0 0.0
    %1826 = vmatprep.subr.mxu0 0.0
    %1827 = vmatpush1.msra.mxu0 0.0
    %1828 = vmatprep.subr.mxu0 0.0
    %1829 = vmatpush1.msra.mxu0 0.0
    %1830 = vmatprep.subr.mxu0 0.0
    %1831 = vmatpush1.msra.mxu0 0.0
    %1832 = vmatprep.subr.mxu0 0.0
    %1833 = vmatpush1.msra.mxu0 0.0
    %1834 = vmatprep.subr.mxu0 0.0
    %1835 = vmatpush1.msra.mxu0 0.0
    %1836 = vmatprep.subr.mxu0 0.0
    %1837 = vmatpush1.msra.mxu0 0.0
    %1838 = vmatprep.subr.mxu0 0.0
    %1839 = vmatpush1.msra.mxu0 0.0
    %1840 = vmatprep.subr.mxu0 0.0
    %1841 = vmatpush1.msra.mxu0 0.0
    %1842 = vmatprep.subr.mxu0 0.0
    %1843 = vmatpush1.msra.mxu0 0.0
    %1844 = vmatprep.subr.mxu0 0.0
    %1845 = vmatpush1.msra.mxu0 0.0
    %1846 = vmatprep.subr.mxu0 0.0
    %1847 = vmatpush1.msra.mxu0 0.0
    %1848 = vmatprep.subr.mxu0 0.0
    %1849 = vmatpush1.msra.mxu0 0.0
    %1850 = vmatprep.mubr.f32.mxu0 0.0
    %1851 = vmatmul.mubr.f32.gmra.mrb[0].mxu0 %v1711
    %v1852 = vpop.f32.mrb[0].mxu0
    %v1853 = vadd.f32 0.0, %v1852
    %v1854 = vpop.f32.mrb[0].mxu0
    %v1855 = vadd.f32 0.0, %v1854
    %1856 = vdwg.mxu0
    %v1861 = vcombine.low %v1782, %v1784
    %v1862 = vcombine.low %v1853, %v1855
    %v1864 = vunpack.c.l.s4 1966171168
    %v1865 = vunpack.c.0.s8 %v1864
    %v1866 = vlaneseq
    %v1867 = vshrl.u32 %v1866, 7
    %v1868 = vsub.s32 %v1865, %v1867
    %v1869 = vrot.slane %v1861, %v1868
    %v1871 = vunpack.c.l.s4 1966171168
    %v1872 = vunpack.c.0.s8 %v1871
    %v1873 = vlaneseq
    %v1874 = vshrl.u32 %v1873, 7
    %v1875 = vsub.s32 %v1872, %v1874
    %v1876 = vrot.slane %v1862, %v1875
    %v1877 = vcombine.low %v1869, %v1876
    %v1879 = vunpack.c.l.s4 1966171168
    %v1880 = vunpack.c.0.s8 %v1879
    %v1881 = vlaneseq
    %v1882 = vshrl.u32 %v1881, 7
    %v1883 = vsub.s32 %v1880, %v1882
    %v1884 = vrot.slane %v1877, %v1883
    %v1886 = vadd.f32 %v1714, %v1884
    %v1887 = vtanh.pop %v1886
    %v1888 = vmul.f32 %v1887, 0.5
    %v1889 = vadd.f32 %v1888, 0.5
    %v1891 = vrot.slane %v1886, 1
    %v1893 = vtanh.pop %v1891
    %v1894 = vmul.f32 %v1893, 0.5
    %v1895 = vadd.f32 %v1894, 0.5
    %v1896 = vrot.slane %v1886, 2
    %v1898 = vtanh.pop %v1896
    %v1899 = vrot.slane %v1886, 3
    %v1901 = vtanh.pop %v1899
    %v1902 = vmul.f32 %v1901, 0.5
    %v1903 = vadd.f32 %v1902, 0.5
    %v1904 = vmul.f32 %v1895, %v1709
    %v1905 = vmul.f32 %v1889, %v1898
    %v1906 = vadd.f32 %v1904, %v1905
    %v1907 = vtanh.pop %v1906
    %v1908 = vmul.f32 %v1903, %v1907
    %1909 = vst [vmem:[#allocation3 + $0x7] sm:$0x1] %v1908
    %v1910 = vld [vmem:[#allocation3] sm:$0xff]
    %v1911 = vld [vmem:[#allocation10] sm:$0xff]
    %v1912 = vld [vmem:[#allocation10 + $0x8] sm:$0xff]
    %v1913 = vld [vmem:[#allocation10 + $0x10] sm:$0xff]
    %v1914 = vld [vmem:[#allocation10 + $0x18] sm:$0xff]
    %v1915 = vld [vmem:[#allocation10 + $0x20] sm:$0xff]
    %v1916 = vld [vmem:[#allocation10 + $0x28] sm:$0xff]
    %v1917 = vld [vmem:[#allocation10 + $0x30] sm:$0xff]
    %v1918 = vld [vmem:[#allocation10 + $0x38] sm:$0xff]
    %v1919 = vld [vmem:[#allocation10 + $0x40] sm:$0xff]
    %v1920 = vld [vmem:[#allocation10 + $0x48] sm:$0xff]
    %v1921 = vld [vmem:[#allocation10 + $0x50] sm:$0xff]
    %v1922 = vld [vmem:[#allocation10 + $0x58] sm:$0xff]
    %v1923 = vld [vmem:[#allocation10 + $0x60] sm:$0xff]
    %v1924 = vld [vmem:[#allocation10 + $0x68] sm:$0xff]
    %v1925 = vld [vmem:[#allocation10 + $0x70] sm:$0xff]
    %v1926 = vld [vmem:[#allocation10 + $0x78] sm:$0xff]
    %v1927 = vld [vmem:[%s5] sm:$0x1]
    %v1929 = vlaneseq
    %v1930 = vshrl.u32 %v1929, 7
    %v1931 = vsub.s32 0, %v1930
    %v1932 = vrot.slane %v1927, %v1931
    %1934 = vmatprep.subr.mxu0 0.0
    %1935 = vmatpush1.msra.mxu0 %v1911
    %1936 = vmatprep.subr.mxu0 0.0
    %1937 = vmatpush1.msra.mxu0 %v1912
    %1938 = vmatprep.subr.mxu0 0.0
    %1939 = vmatpush1.msra.mxu0 %v1913
    %1940 = vmatprep.subr.mxu0 0.0
    %1941 = vmatpush1.msra.mxu0 %v1914
    %1942 = vmatprep.subr.mxu0 0.0
    %1943 = vmatpush1.msra.mxu0 %v1915
    %1944 = vmatprep.subr.mxu0 0.0
    %1945 = vmatpush1.msra.mxu0 %v1916
    %1946 = vmatprep.subr.mxu0 0.0
    %1947 = vmatpush1.msra.mxu0 %v1917
    %1948 = vmatprep.subr.mxu0 0.0
    %1949 = vmatpush1.msra.mxu0 %v1918
    %1950 = vmatprep.subr.mxu0 0.0
    %1951 = vmatpush1.msra.mxu0 %v1919
    %1952 = vmatprep.subr.mxu0 0.0
    %1953 = vmatpush1.msra.mxu0 %v1920
    %1954 = vmatprep.subr.mxu0 0.0
    %1955 = vmatpush1.msra.mxu0 %v1921
    %1956 = vmatprep.subr.mxu0 0.0
    %1957 = vmatpush1.msra.mxu0 %v1922
    %1958 = vmatprep.subr.mxu0 0.0
    %1959 = vmatpush1.msra.mxu0 %v1923
    %1960 = vmatprep.subr.mxu0 0.0
    %1961 = vmatpush1.msra.mxu0 %v1924
    %1962 = vmatprep.subr.mxu0 0.0
    %1963 = vmatpush1.msra.mxu0 %v1925
    %1964 = vmatprep.subr.mxu0 0.0
    %1965 = vmatpush1.msra.mxu0 %v1926
    %1966 = vmatprep.subr.mxu0 0.0
    %1967 = vmatpush1.msra.mxu0 0.0
    %1968 = vmatprep.subr.mxu0 0.0
    %1969 = vmatpush1.msra.mxu0 0.0
    %1970 = vmatprep.subr.mxu0 0.0
    %1971 = vmatpush1.msra.mxu0 0.0
    %1972 = vmatprep.subr.mxu0 0.0
    %1973 = vmatpush1.msra.mxu0 0.0
    %1974 = vmatprep.subr.mxu0 0.0
    %1975 = vmatpush1.msra.mxu0 0.0
    %1976 = vmatprep.subr.mxu0 0.0
    %1977 = vmatpush1.msra.mxu0 0.0
    %1978 = vmatprep.subr.mxu0 0.0
    %1979 = vmatpush1.msra.mxu0 0.0
    %1980 = vmatprep.subr.mxu0 0.0
    %1981 = vmatpush1.msra.mxu0 0.0
    %1982 = vmatprep.subr.mxu0 0.0
    %1983 = vmatpush1.msra.mxu0 0.0
    %1984 = vmatprep.subr.mxu0 0.0
    %1985 = vmatpush1.msra.mxu0 0.0
    %1986 = vmatprep.subr.mxu0 0.0
    %1987 = vmatpush1.msra.mxu0 0.0
    %1988 = vmatprep.subr.mxu0 0.0
    %1989 = vmatpush1.msra.mxu0 0.0
    %1990 = vmatprep.subr.mxu0 0.0
    %1991 = vmatpush1.msra.mxu0 0.0
    %1992 = vmatprep.subr.mxu0 0.0
    %1993 = vmatpush1.msra.mxu0 0.0
    %1994 = vmatprep.subr.mxu0 0.0
    %1995 = vmatpush1.msra.mxu0 0.0
    %1996 = vmatprep.subr.mxu0 0.0
    %1997 = vmatpush1.msra.mxu0 0.0
    %1998 = vmatprep.mubr.f32.mxu0 0.0
    %1999 = vmatmul.mubr.f32.gmra.mrb[0].mxu0 %v1910
    %v2000 = vpop.f32.mrb[0].mxu0
    %v2001 = vadd.f32 %v1932, %v2000
    %v2002 = vpop.f32.mrb[0].mxu0
    %2003 = vdwg.mxu0
    %v2004 = vtanh.pop %v2001
    %2005 = vst [vmem:[#allocation12] sm:$0xff] %v2004
    // Predicated region
    $region42: #{tpu_custom_call.1} parent=1 // pred_check
      _
    $region43: #{tpu_custom_call.1} parent=1 // pred_check_branch
      %2007 = sbr.rel (0) target = $region45
    $region44: #{tpu_custom_call.1} parent=1 // pred_region
      %s2009 = ssub.s32 128, 128
      %2010 = vsyncadd [#allocation6], %s2009
      %s2012 = sshll.u32 [#allocation12], 4
      %s2013 = int_to_ptr.vmem [resolvable:$true] %s2012
      %2015 = dma.vmem_to_hbm [thread:$0]  %s2013, 128, %s6, [#allocation6]
    $region45: #{tpu_custom_call.1} parent=1 // pred_fallthru
      _
    // Predicated region
    $region46: #{tpu_custom_call.1} parent=1 // pred_check
      _
    $region47: #{tpu_custom_call.1} parent=1 // pred_check_branch
      %2017 = sbr.rel (0) target = $region49
    $region48: #{tpu_custom_call.1} parent=1 // pred_region
      %2018 = dma.done [#allocation6], 128
    $region49: #{tpu_custom_call.1} parent=1 // pred_fallthru
      _
    %2019 = vsyncpa [#allocation5], 1
    %2020 = vsyncpa [#allocation8], 1
    %2021 = vsyncpa [#allocation11], 1
    %2022 = vsyncpa [#allocation6], 1

</llo_original>
